<compile_context>
chip_gen: v5e
topology: v5e:2x2
jax: 0.10.0
libtpu: 0.0.40
codegen_flags: <defaults>
</compile_context>

<pallas_src>
import functools
import math

import jax
import jax.numpy as jnp
from jax.experimental import pallas as pl
from jax.experimental.pallas import tpu as pltpu


def _attention_kernel(x_ref, wqkv_ref, wo_ref, bo_ref, o_ref, *,
                      block_b, n_tokens, heads, dim_head):
    """One grid step: `block_b` full batch rows, all heads fused.

    x_ref   : (block_b, N, dim)        input rows
    wqkv_ref: (dim, 3*inner_dim)       full QKV weight slab (Q columns pre-scaled)
    wo_ref  : (inner_dim, dim)         full output-projection slab
    bo_ref  : (1, dim)                 output-projection bias
    o_ref   : (block_b, N, dim)        output rows
    """
    N, H, dh = n_tokens, heads, dim_head
    inner = H * dh
    dim = x_ref.shape[-1]

    # Flatten batch rows into the MXU M dimension (layout-compatible: N % 8 == 0).
    x = x_ref[...].reshape(block_b * N, dim)                      # (Bt*N, dim)

    # Single dense QKV projection (scale already folded into the Q columns).
    qkv = jnp.dot(x, wqkv_ref[...], preferred_element_type=jnp.float32)
    qkv = qkv.astype(x.dtype)                                     # narrow MXU operands

    # Per-(batch, head) scores / softmax / PV. These are the only dim_head-wide
    # matmuls left; everything else runs at >= 128 lanes. Softmax math stays f32.
    rows = []
    for b in range(block_b):
        r0 = b * N
        outs = []
        for h in range(H):
            c0 = h * dh
            q = qkv[r0:r0 + N, c0:c0 + dh]                        # (N, dh) pre-scaled
            k = qkv[r0:r0 + N, inner + c0:inner + c0 + dh]        # (N, dh)
            v = qkv[r0:r0 + N, 2 * inner + c0:2 * inner + c0 + dh]

            s = jax.lax.dot_general(q, k, (((1,), (1,)), ((), ())),
                                    preferred_element_type=jnp.float32)   # (N, N) f32
            s = s - jnp.max(s, axis=-1, keepdims=True)
            p = jnp.exp(s)                                        # EUP
            l = jnp.sum(p, axis=-1, keepdims=True)                # (N, 1) f32
            pv = jnp.dot(p.astype(x.dtype), v,
                         preferred_element_type=jnp.float32)      # (N, dh) f32
            # Deferred normalization: reciprocal on the EUP + N*dh multiplies,
            # instead of N*N VALU divides.
            outs.append(pv * pl.reciprocal(l, approx=True))
        rows.append(jnp.concatenate(outs, axis=1))                # (N, inner)
    head_out = jnp.concatenate(rows, axis=0)                      # (Bt*N, inner) f32

    # Single dense output projection + bias.
    proj = jnp.dot(head_out.astype(x.dtype), wo_ref[...],
                   preferred_element_type=jnp.float32)            # (Bt*N, dim) f32
    proj = proj + bo_ref[...].astype(jnp.float32)
    o_ref[...] = proj.reshape(o_ref.shape).astype(o_ref.dtype)


@functools.partial(jax.jit, static_argnames=("heads", "dim_head", "block_b"))
def attention(x, w_qkv, w_out, b_out, *, heads, dim_head, block_b=1):
    """x: (B, N, dim) -> (B, N, dim). Weights stored in (in, out) layout."""
    B, N, dim = x.shape
    inner = heads * dim_head
    assert B % block_b == 0, (B, block_b)
    scale = dim_head ** (-0.5)

    project_out = not (heads == 1 and dim_head == dim)
    if not project_out:
        # PyTorch uses nn.Identity(); equivalent to projecting with I and zero bias.
        w_out = jnp.eye(dim, dtype=x.dtype)
        b_out = jnp.zeros((dim,), dtype=x.dtype)

    # Fold the attention scale into the Q columns -> zero in-kernel scaling cost.
    w_qkv = w_qkv.at[:, :inner].mul(scale)
    bo = b_out.reshape(1, dim)

    grid = (B // block_b,)
    itemsize = jnp.dtype(x.dtype).itemsize

    flops = (2 * B * N * dim * 3 * inner            # QKV projection
             + 2 * B * heads * N * N * dim_head * 2  # q@k^T and p@v
             + 2 * B * N * inner * dim)              # output projection
    bytes_accessed = (2 * B * N * dim + dim * 3 * inner + inner * dim + dim) * itemsize

    # Rough per-step VMEM budget: double-buffered x/out blocks, resident weight
    # slabs, and the f32 intermediates. Clamp to v7x's 64 MiB physical VMEM.
    step_bytes = (2 * 2 * block_b * N * dim * itemsize
                  + 2 * (dim * 3 * inner + inner * dim + dim) * itemsize
                  + block_b * N * 3 * inner * 4          # qkv (f32 acc)
                  + 2 * N * N * 4                        # scores + exp
                  + block_b * N * inner * 4)             # head_out
    vmem_limit = int(min(64 * 1024 * 1024, max(16 * 1024 * 1024, 2 * step_bytes)))

    out = pl.pallas_call(
        functools.partial(_attention_kernel, block_b=block_b, n_tokens=N,
                          heads=heads, dim_head=dim_head),
        out_shape=jax.ShapeDtypeStruct((B, N, dim), x.dtype),
        grid_spec=pltpu.PrefetchScalarGridSpec(
            num_scalar_prefetch=0,
            grid=grid,
            in_specs=[
                pl.BlockSpec((block_b, N, dim), lambda i: (i, 0, 0)),  # x rows
                pl.BlockSpec((dim, 3 * inner), lambda i: (0, 0)),      # full Wqkv slab
                pl.BlockSpec((inner, dim), lambda i: (0, 0)),          # full Wout slab
                pl.BlockSpec((1, dim), lambda i: (0, 0)),              # bias
            ],
            out_specs=pl.BlockSpec((block_b, N, dim), lambda i: (i, 0, 0)),
        ),
        compiler_params=pltpu.CompilerParams(
            dimension_semantics=("parallel",),
            vmem_limit_bytes=vmem_limit,
        ),
        cost_estimate=pl.CostEstimate(
            flops=flops,
            transcendentals=B * heads * N * N,
            bytes_accessed=bytes_accessed,
        ),
    )(x, w_qkv, w_out, bo)
    return out


def pick_block_b(B, N, min_grid=2):
    """Batch rows per grid step: aim for >=128 MXU rows while keeping the grid
    at least `min_grid` steps (so multi-TensorCore chips still shard it)."""
    bb = max(1, min(B, -(-128 // max(N, 1))))
    while bb > 1 and (B % bb != 0 or (B // bb) < min(min_grid, B)):
        bb -= 1
    return bb


def init_attention_params(key, dim, heads, dim_head, dtype=jnp.float32):
    """nn.Linear-style init (uniform +-1/sqrt(fan_in)); (in, out) weight layout."""
    inner_dim = heads * dim_head
    k1, k2, k3 = jax.random.split(key, 3)
    bq = 1.0 / math.sqrt(dim)
    bo = 1.0 / math.sqrt(inner_dim)
    w_qkv = jax.random.uniform(k1, (dim, 3 * inner_dim), dtype, -bq, bq)
    w_out = jax.random.uniform(k2, (inner_dim, dim), dtype, -bo, bo)
    b_out = jax.random.uniform(k3, (dim,), dtype, -bo, bo)
    return w_qkv, w_out, b_out


def attention_ref(x, w_qkv, w_out, b_out, heads, dim_head):
    """Pure-JAX reference (high-precision matmuls)."""
    B, N, dim = x.shape
    inner_dim = heads * dim_head
    hp = jax.lax.Precision.HIGHEST
    qkv = jnp.dot(x, w_qkv, precision=hp)
    q, k, v = jnp.split(qkv, 3, axis=-1)

    def to_heads(t):
        return t.reshape(B, N, heads, dim_head).transpose(0, 2, 1, 3)

    q, k, v = to_heads(q), to_heads(k), to_heads(v)
    dots = jnp.einsum('bhid,bhjd->bhij', q, k, precision=hp) * (dim_head ** -0.5)
    attn = jax.nn.softmax(dots, axis=-1)
    out = jnp.einsum('bhij,bhjd->bhid', attn, v, precision=hp)
    out = out.transpose(0, 2, 1, 3).reshape(B, N, inner_dim)
    if not (heads == 1 and dim_head == dim):
        out = jnp.dot(out, w_out, precision=hp) + b_out
    return out


if __name__ == "__main__":
    # Small but lane/sublane-friendly shapes: dim multiple of 128, N multiple of 16.
    B, N, dim = 4, 16, 128
    heads, dim_head = 4, 32

    key = jax.random.PRNGKey(0)
    kx, kp = jax.random.split(key)
    x = jax.random.normal(kx, (B, N, dim), dtype=jnp.float32)
    w_qkv, w_out, b_out = init_attention_params(kp, dim, heads, dim_head)

    block_b = pick_block_b(B, N)   # -> 2: 32 MXU rows per step, grid=(2,) for megacore
    ref = attention_ref(x, w_qkv, w_out, b_out, heads, dim_head)

    # f32 run (approx reciprocal costs a little precision vs the HIGHEST-precision ref).
    out = attention(x, w_qkv, w_out, b_out,
                    heads=heads, dim_head=dim_head, block_b=block_b)
    out = jax.block_until_ready(out)
    assert out.shape == ref.shape, (out.shape, ref.shape)
    err = float(jnp.max(jnp.abs(out - ref)))
    assert err < 5e-3, f"f32 mismatch vs reference, max err {err}"

    # bf16 run: the MXU-friendly production configuration (f32 accumulation inside).
    out_bf16 = attention(x.astype(jnp.bfloat16), w_qkv.astype(jnp.bfloat16),
                         w_out.astype(jnp.bfloat16), b_out.astype(jnp.bfloat16),
                         heads=heads, dim_head=dim_head, block_b=block_b)
    out_bf16 = jax.block_until_ready(out_bf16)
    err_bf16 = float(jnp.max(jnp.abs(out_bf16.astype(jnp.float32) - ref)))
    assert err_bf16 < 1e-1, f"bf16 mismatch vs reference, max err {err_bf16}"

    print("KERNEL_OK")
</pallas_src>

<mosaic_0001>
module attributes {stable_mosaic.version = 11 : i64} {
  func.func @_attention_kernel(%arg0: i32, %arg1: memref<2x16x128xf32, #tpu.memory_space<vmem>>, %arg2: memref<128x384xf32, #tpu.memory_space<vmem>>, %arg3: memref<128x128xf32, #tpu.memory_space<vmem>>, %arg4: memref<1x128xf32, #tpu.memory_space<vmem>>, %arg5: memref<2x16x128xf32, #tpu.memory_space<vmem>>) attributes {dimension_semantics = [#tpu.dimension_semantics<parallel>], iteration_bounds = array<i64: 2>, scalar_prefetch = 0 : i64, scratch_operands = 0 : i64, tpu.core_type = #tpu.core_type<tc>, window_params = [{transform_indices = @transform_0, window_bounds = array<i64: 2, 16, 128>}, {pipeline_mode = #tpu.pipeline_mode<synchronous>, transform_indices = @transform_1, window_bounds = array<i64: 128, 384>}, {pipeline_mode = #tpu.pipeline_mode<synchronous>, transform_indices = @transform_2, window_bounds = array<i64: 128, 128>}, {pipeline_mode = #tpu.pipeline_mode<synchronous>, transform_indices = @transform_3, window_bounds = array<i64: 1, 128>}, {transform_indices = @transform_4, window_bounds = array<i64: 2, 16, 128>}]} {
    %c0 = arith.constant 0 : index
    %c0_0 = arith.constant 0 : index
    %c0_1 = arith.constant 0 : index
    %0 = vector.load %arg1[%c0, %c0_0, %c0_1] : memref<2x16x128xf32, #tpu.memory_space<vmem>>, vector<2x16x128xf32>
    %1 = vector.shape_cast %0 : vector<2x16x128xf32> to vector<32x128xf32>
    %c0_2 = arith.constant 0 : index
    %c0_3 = arith.constant 0 : index
    %2 = vector.load %arg2[%c0_2, %c0_3] : memref<128x384xf32, #tpu.memory_space<vmem>>, vector<128x384xf32>
    %cst = arith.constant dense<0.000000e+00> : vector<32x384xf32>
    %3 = tpu.matmul %1, %2, %cst {dimension_numbers = #tpu.dot_dimension_numbers<[1], [0], [0], [1], [0, 0, 1, 1], [], []>} : vector<32x128xf32>, vector<128x384xf32>, vector<32x384xf32> -> vector<32x384xf32>
    %4 = vector.extract_strided_slice %3 {offsets = [0, 0], sizes = [16, 32], strides = [1, 1]} : vector<32x384xf32> to vector<16x32xf32>
    %5 = vector.extract_strided_slice %3 {offsets = [0, 128], sizes = [16, 32], strides = [1, 1]} : vector<32x384xf32> to vector<16x32xf32>
    %6 = vector.extract_strided_slice %3 {offsets = [0, 256], sizes = [16, 32], strides = [1, 1]} : vector<32x384xf32> to vector<16x32xf32>
    %cst_4 = arith.constant dense<0.000000e+00> : vector<16x16xf32>
    %7 = tpu.matmul %4, %5, %cst_4 {dimension_numbers = #tpu.dot_dimension_numbers<[1], [1], [0], [0], [0, 0, 1, 0], [], []>} : vector<16x32xf32>, vector<16x32xf32>, vector<16x16xf32> -> vector<16x16xf32>
    %cst_5 = arith.constant dense<0xFF800000> : vector<16xf32>
    %8 = vector.multi_reduction <maximumf>, %7, %cst_5 [1] : vector<16x16xf32> to vector<16xf32>
    %9 = vector.shape_cast %8 : vector<16xf32> to vector<16x1xf32>
    %10 = vector.broadcast %9 : vector<16x1xf32> to vector<16x16xf32>
    %11 = arith.subf %7, %10 : vector<16x16xf32>
    %12 = math.exp %11 : vector<16x16xf32>
    %cst_6 = arith.constant dense<0.000000e+00> : vector<16xf32>
    %13 = vector.multi_reduction <add>, %12, %cst_6 [1] : vector<16x16xf32> to vector<16xf32>
    %14 = vector.shape_cast %13 : vector<16xf32> to vector<16x1xf32>
    %cst_7 = arith.constant dense<0.000000e+00> : vector<16x32xf32>
    %15 = tpu.matmul %12, %6, %cst_7 {dimension_numbers = #tpu.dot_dimension_numbers<[1], [0], [0], [1], [0, 0, 1, 1], [], []>} : vector<16x16xf32>, vector<16x32xf32>, vector<16x32xf32> -> vector<16x32xf32>
    %16 = tpu.reciprocal %14 {approx = true} : vector<16x1xf32> -> vector<16x1xf32>
    %17 = vector.broadcast %16 : vector<16x1xf32> to vector<16x32xf32>
    %18 = arith.mulf %15, %17 : vector<16x32xf32>
    %19 = vector.extract_strided_slice %3 {offsets = [0, 32], sizes = [16, 32], strides = [1, 1]} : vector<32x384xf32> to vector<16x32xf32>
    %20 = vector.extract_strided_slice %3 {offsets = [0, 160], sizes = [16, 32], strides = [1, 1]} : vector<32x384xf32> to vector<16x32xf32>
    %21 = vector.extract_strided_slice %3 {offsets = [0, 288], sizes = [16, 32], strides = [1, 1]} : vector<32x384xf32> to vector<16x32xf32>
    %cst_8 = arith.constant dense<0.000000e+00> : vector<16x16xf32>
    %22 = tpu.matmul %19, %20, %cst_8 {dimension_numbers = #tpu.dot_dimension_numbers<[1], [1], [0], [0], [0, 0, 1, 0], [], []>} : vector<16x32xf32>, vector<16x32xf32>, vector<16x16xf32> -> vector<16x16xf32>
    %cst_9 = arith.constant dense<0xFF800000> : vector<16xf32>
    %23 = vector.multi_reduction <maximumf>, %22, %cst_9 [1] : vector<16x16xf32> to vector<16xf32>
    %24 = vector.shape_cast %23 : vector<16xf32> to vector<16x1xf32>
    %25 = vector.broadcast %24 : vector<16x1xf32> to vector<16x16xf32>
    %26 = arith.subf %22, %25 : vector<16x16xf32>
    %27 = math.exp %26 : vector<16x16xf32>
    %cst_10 = arith.constant dense<0.000000e+00> : vector<16xf32>
    %28 = vector.multi_reduction <add>, %27, %cst_10 [1] : vector<16x16xf32> to vector<16xf32>
    %29 = vector.shape_cast %28 : vector<16xf32> to vector<16x1xf32>
    %cst_11 = arith.constant dense<0.000000e+00> : vector<16x32xf32>
    %30 = tpu.matmul %27, %21, %cst_11 {dimension_numbers = #tpu.dot_dimension_numbers<[1], [0], [0], [1], [0, 0, 1, 1], [], []>} : vector<16x16xf32>, vector<16x32xf32>, vector<16x32xf32> -> vector<16x32xf32>
    %31 = tpu.reciprocal %29 {approx = true} : vector<16x1xf32> -> vector<16x1xf32>
    %32 = vector.broadcast %31 : vector<16x1xf32> to vector<16x32xf32>
    %33 = arith.mulf %30, %32 : vector<16x32xf32>
    %34 = vector.extract_strided_slice %3 {offsets = [0, 64], sizes = [16, 32], strides = [1, 1]} : vector<32x384xf32> to vector<16x32xf32>
    %35 = vector.extract_strided_slice %3 {offsets = [0, 192], sizes = [16, 32], strides = [1, 1]} : vector<32x384xf32> to vector<16x32xf32>
    %36 = vector.extract_strided_slice %3 {offsets = [0, 320], sizes = [16, 32], strides = [1, 1]} : vector<32x384xf32> to vector<16x32xf32>
    %cst_12 = arith.constant dense<0.000000e+00> : vector<16x16xf32>
    %37 = tpu.matmul %34, %35, %cst_12 {dimension_numbers = #tpu.dot_dimension_numbers<[1], [1], [0], [0], [0, 0, 1, 0], [], []>} : vector<16x32xf32>, vector<16x32xf32>, vector<16x16xf32> -> vector<16x16xf32>
    %cst_13 = arith.constant dense<0xFF800000> : vector<16xf32>
    %38 = vector.multi_reduction <maximumf>, %37, %cst_13 [1] : vector<16x16xf32> to vector<16xf32>
    %39 = vector.shape_cast %38 : vector<16xf32> to vector<16x1xf32>
    %40 = vector.broadcast %39 : vector<16x1xf32> to vector<16x16xf32>
    %41 = arith.subf %37, %40 : vector<16x16xf32>
    %42 = math.exp %41 : vector<16x16xf32>
    %cst_14 = arith.constant dense<0.000000e+00> : vector<16xf32>
    %43 = vector.multi_reduction <add>, %42, %cst_14 [1] : vector<16x16xf32> to vector<16xf32>
    %44 = vector.shape_cast %43 : vector<16xf32> to vector<16x1xf32>
    %cst_15 = arith.constant dense<0.000000e+00> : vector<16x32xf32>
    %45 = tpu.matmul %42, %36, %cst_15 {dimension_numbers = #tpu.dot_dimension_numbers<[1], [0], [0], [1], [0, 0, 1, 1], [], []>} : vector<16x16xf32>, vector<16x32xf32>, vector<16x32xf32> -> vector<16x32xf32>
    %46 = tpu.reciprocal %44 {approx = true} : vector<16x1xf32> -> vector<16x1xf32>
    %47 = vector.broadcast %46 : vector<16x1xf32> to vector<16x32xf32>
    %48 = arith.mulf %45, %47 : vector<16x32xf32>
    %49 = vector.extract_strided_slice %3 {offsets = [0, 96], sizes = [16, 32], strides = [1, 1]} : vector<32x384xf32> to vector<16x32xf32>
    %50 = vector.extract_strided_slice %3 {offsets = [0, 224], sizes = [16, 32], strides = [1, 1]} : vector<32x384xf32> to vector<16x32xf32>
    %51 = vector.extract_strided_slice %3 {offsets = [0, 352], sizes = [16, 32], strides = [1, 1]} : vector<32x384xf32> to vector<16x32xf32>
    %cst_16 = arith.constant dense<0.000000e+00> : vector<16x16xf32>
    %52 = tpu.matmul %49, %50, %cst_16 {dimension_numbers = #tpu.dot_dimension_numbers<[1], [1], [0], [0], [0, 0, 1, 0], [], []>} : vector<16x32xf32>, vector<16x32xf32>, vector<16x16xf32> -> vector<16x16xf32>
    %cst_17 = arith.constant dense<0xFF800000> : vector<16xf32>
    %53 = vector.multi_reduction <maximumf>, %52, %cst_17 [1] : vector<16x16xf32> to vector<16xf32>
    %54 = vector.shape_cast %53 : vector<16xf32> to vector<16x1xf32>
    %55 = vector.broadcast %54 : vector<16x1xf32> to vector<16x16xf32>
    %56 = arith.subf %52, %55 : vector<16x16xf32>
    %57 = math.exp %56 : vector<16x16xf32>
    %cst_18 = arith.constant dense<0.000000e+00> : vector<16xf32>
    %58 = vector.multi_reduction <add>, %57, %cst_18 [1] : vector<16x16xf32> to vector<16xf32>
    %59 = vector.shape_cast %58 : vector<16xf32> to vector<16x1xf32>
    %cst_19 = arith.constant dense<0.000000e+00> : vector<16x32xf32>
    %60 = tpu.matmul %57, %51, %cst_19 {dimension_numbers = #tpu.dot_dimension_numbers<[1], [0], [0], [1], [0, 0, 1, 1], [], []>} : vector<16x16xf32>, vector<16x32xf32>, vector<16x32xf32> -> vector<16x32xf32>
    %61 = tpu.reciprocal %59 {approx = true} : vector<16x1xf32> -> vector<16x1xf32>
    %62 = vector.broadcast %61 : vector<16x1xf32> to vector<16x32xf32>
    %63 = arith.mulf %60, %62 : vector<16x32xf32>
    %64 = tpu.concatenate %18, %33, %48, %63 in 1 : vector<16x32xf32>, vector<16x32xf32>, vector<16x32xf32>, vector<16x32xf32> -> vector<16x128xf32>
    %65 = vector.extract_strided_slice %3 {offsets = [16, 0], sizes = [16, 32], strides = [1, 1]} : vector<32x384xf32> to vector<16x32xf32>
    %66 = vector.extract_strided_slice %3 {offsets = [16, 128], sizes = [16, 32], strides = [1, 1]} : vector<32x384xf32> to vector<16x32xf32>
    %67 = vector.extract_strided_slice %3 {offsets = [16, 256], sizes = [16, 32], strides = [1, 1]} : vector<32x384xf32> to vector<16x32xf32>
    %cst_20 = arith.constant dense<0.000000e+00> : vector<16x16xf32>
    %68 = tpu.matmul %65, %66, %cst_20 {dimension_numbers = #tpu.dot_dimension_numbers<[1], [1], [0], [0], [0, 0, 1, 0], [], []>} : vector<16x32xf32>, vector<16x32xf32>, vector<16x16xf32> -> vector<16x16xf32>
    %cst_21 = arith.constant dense<0xFF800000> : vector<16xf32>
    %69 = vector.multi_reduction <maximumf>, %68, %cst_21 [1] : vector<16x16xf32> to vector<16xf32>
    %70 = vector.shape_cast %69 : vector<16xf32> to vector<16x1xf32>
    %71 = vector.broadcast %70 : vector<16x1xf32> to vector<16x16xf32>
    %72 = arith.subf %68, %71 : vector<16x16xf32>
    %73 = math.exp %72 : vector<16x16xf32>
    %cst_22 = arith.constant dense<0.000000e+00> : vector<16xf32>
    %74 = vector.multi_reduction <add>, %73, %cst_22 [1] : vector<16x16xf32> to vector<16xf32>
    %75 = vector.shape_cast %74 : vector<16xf32> to vector<16x1xf32>
    %cst_23 = arith.constant dense<0.000000e+00> : vector<16x32xf32>
    %76 = tpu.matmul %73, %67, %cst_23 {dimension_numbers = #tpu.dot_dimension_numbers<[1], [0], [0], [1], [0, 0, 1, 1], [], []>} : vector<16x16xf32>, vector<16x32xf32>, vector<16x32xf32> -> vector<16x32xf32>
    %77 = tpu.reciprocal %75 {approx = true} : vector<16x1xf32> -> vector<16x1xf32>
    %78 = vector.broadcast %77 : vector<16x1xf32> to vector<16x32xf32>
    %79 = arith.mulf %76, %78 : vector<16x32xf32>
    %80 = vector.extract_strided_slice %3 {offsets = [16, 32], sizes = [16, 32], strides = [1, 1]} : vector<32x384xf32> to vector<16x32xf32>
    %81 = vector.extract_strided_slice %3 {offsets = [16, 160], sizes = [16, 32], strides = [1, 1]} : vector<32x384xf32> to vector<16x32xf32>
    %82 = vector.extract_strided_slice %3 {offsets = [16, 288], sizes = [16, 32], strides = [1, 1]} : vector<32x384xf32> to vector<16x32xf32>
    %cst_24 = arith.constant dense<0.000000e+00> : vector<16x16xf32>
    %83 = tpu.matmul %80, %81, %cst_24 {dimension_numbers = #tpu.dot_dimension_numbers<[1], [1], [0], [0], [0, 0, 1, 0], [], []>} : vector<16x32xf32>, vector<16x32xf32>, vector<16x16xf32> -> vector<16x16xf32>
    %cst_25 = arith.constant dense<0xFF800000> : vector<16xf32>
    %84 = vector.multi_reduction <maximumf>, %83, %cst_25 [1] : vector<16x16xf32> to vector<16xf32>
    %85 = vector.shape_cast %84 : vector<16xf32> to vector<16x1xf32>
    %86 = vector.broadcast %85 : vector<16x1xf32> to vector<16x16xf32>
    %87 = arith.subf %83, %86 : vector<16x16xf32>
    %88 = math.exp %87 : vector<16x16xf32>
    %cst_26 = arith.constant dense<0.000000e+00> : vector<16xf32>
    %89 = vector.multi_reduction <add>, %88, %cst_26 [1] : vector<16x16xf32> to vector<16xf32>
    %90 = vector.shape_cast %89 : vector<16xf32> to vector<16x1xf32>
    %cst_27 = arith.constant dense<0.000000e+00> : vector<16x32xf32>
    %91 = tpu.matmul %88, %82, %cst_27 {dimension_numbers = #tpu.dot_dimension_numbers<[1], [0], [0], [1], [0, 0, 1, 1], [], []>} : vector<16x16xf32>, vector<16x32xf32>, vector<16x32xf32> -> vector<16x32xf32>
    %92 = tpu.reciprocal %90 {approx = true} : vector<16x1xf32> -> vector<16x1xf32>
    %93 = vector.broadcast %92 : vector<16x1xf32> to vector<16x32xf32>
    %94 = arith.mulf %91, %93 : vector<16x32xf32>
    %95 = vector.extract_strided_slice %3 {offsets = [16, 64], sizes = [16, 32], strides = [1, 1]} : vector<32x384xf32> to vector<16x32xf32>
    %96 = vector.extract_strided_slice %3 {offsets = [16, 192], sizes = [16, 32], strides = [1, 1]} : vector<32x384xf32> to vector<16x32xf32>
    %97 = vector.extract_strided_slice %3 {offsets = [16, 320], sizes = [16, 32], strides = [1, 1]} : vector<32x384xf32> to vector<16x32xf32>
    %cst_28 = arith.constant dense<0.000000e+00> : vector<16x16xf32>
    %98 = tpu.matmul %95, %96, %cst_28 {dimension_numbers = #tpu.dot_dimension_numbers<[1], [1], [0], [0], [0, 0, 1, 0], [], []>} : vector<16x32xf32>, vector<16x32xf32>, vector<16x16xf32> -> vector<16x16xf32>
    %cst_29 = arith.constant dense<0xFF800000> : vector<16xf32>
    %99 = vector.multi_reduction <maximumf>, %98, %cst_29 [1] : vector<16x16xf32> to vector<16xf32>
    %100 = vector.shape_cast %99 : vector<16xf32> to vector<16x1xf32>
    %101 = vector.broadcast %100 : vector<16x1xf32> to vector<16x16xf32>
    %102 = arith.subf %98, %101 : vector<16x16xf32>
    %103 = math.exp %102 : vector<16x16xf32>
    %cst_30 = arith.constant dense<0.000000e+00> : vector<16xf32>
    %104 = vector.multi_reduction <add>, %103, %cst_30 [1] : vector<16x16xf32> to vector<16xf32>
    %105 = vector.shape_cast %104 : vector<16xf32> to vector<16x1xf32>
    %cst_31 = arith.constant dense<0.000000e+00> : vector<16x32xf32>
    %106 = tpu.matmul %103, %97, %cst_31 {dimension_numbers = #tpu.dot_dimension_numbers<[1], [0], [0], [1], [0, 0, 1, 1], [], []>} : vector<16x16xf32>, vector<16x32xf32>, vector<16x32xf32> -> vector<16x32xf32>
    %107 = tpu.reciprocal %105 {approx = true} : vector<16x1xf32> -> vector<16x1xf32>
    %108 = vector.broadcast %107 : vector<16x1xf32> to vector<16x32xf32>
    %109 = arith.mulf %106, %108 : vector<16x32xf32>
    %110 = vector.extract_strided_slice %3 {offsets = [16, 96], sizes = [16, 32], strides = [1, 1]} : vector<32x384xf32> to vector<16x32xf32>
    %111 = vector.extract_strided_slice %3 {offsets = [16, 224], sizes = [16, 32], strides = [1, 1]} : vector<32x384xf32> to vector<16x32xf32>
    %112 = vector.extract_strided_slice %3 {offsets = [16, 352], sizes = [16, 32], strides = [1, 1]} : vector<32x384xf32> to vector<16x32xf32>
    %cst_32 = arith.constant dense<0.000000e+00> : vector<16x16xf32>
    %113 = tpu.matmul %110, %111, %cst_32 {dimension_numbers = #tpu.dot_dimension_numbers<[1], [1], [0], [0], [0, 0, 1, 0], [], []>} : vector<16x32xf32>, vector<16x32xf32>, vector<16x16xf32> -> vector<16x16xf32>
    %cst_33 = arith.constant dense<0xFF800000> : vector<16xf32>
    %114 = vector.multi_reduction <maximumf>, %113, %cst_33 [1] : vector<16x16xf32> to vector<16xf32>
    %115 = vector.shape_cast %114 : vector<16xf32> to vector<16x1xf32>
    %116 = vector.broadcast %115 : vector<16x1xf32> to vector<16x16xf32>
    %117 = arith.subf %113, %116 : vector<16x16xf32>
    %118 = math.exp %117 : vector<16x16xf32>
    %cst_34 = arith.constant dense<0.000000e+00> : vector<16xf32>
    %119 = vector.multi_reduction <add>, %118, %cst_34 [1] : vector<16x16xf32> to vector<16xf32>
    %120 = vector.shape_cast %119 : vector<16xf32> to vector<16x1xf32>
    %cst_35 = arith.constant dense<0.000000e+00> : vector<16x32xf32>
    %121 = tpu.matmul %118, %112, %cst_35 {dimension_numbers = #tpu.dot_dimension_numbers<[1], [0], [0], [1], [0, 0, 1, 1], [], []>} : vector<16x16xf32>, vector<16x32xf32>, vector<16x32xf32> -> vector<16x32xf32>
    %122 = tpu.reciprocal %120 {approx = true} : vector<16x1xf32> -> vector<16x1xf32>
    %123 = vector.broadcast %122 : vector<16x1xf32> to vector<16x32xf32>
    %124 = arith.mulf %121, %123 : vector<16x32xf32>
    %125 = tpu.concatenate %79, %94, %109, %124 in 1 : vector<16x32xf32>, vector<16x32xf32>, vector<16x32xf32>, vector<16x32xf32> -> vector<16x128xf32>
    %126 = tpu.concatenate %64, %125 in 0 : vector<16x128xf32>, vector<16x128xf32> -> vector<32x128xf32>
    %c0_36 = arith.constant 0 : index
    %c0_37 = arith.constant 0 : index
    %127 = vector.load %arg3[%c0_36, %c0_37] : memref<128x128xf32, #tpu.memory_space<vmem>>, vector<128x128xf32>
    %cst_38 = arith.constant dense<0.000000e+00> : vector<32x128xf32>
    %128 = tpu.matmul %126, %127, %cst_38 {dimension_numbers = #tpu.dot_dimension_numbers<[1], [0], [0], [1], [0, 0, 1, 1], [], []>} : vector<32x128xf32>, vector<128x128xf32>, vector<32x128xf32> -> vector<32x128xf32>
    %c0_39 = arith.constant 0 : index
    %c0_40 = arith.constant 0 : index
    %129 = vector.load %arg4[%c0_39, %c0_40] : memref<1x128xf32, #tpu.memory_space<vmem>>, vector<1x128xf32>
    %130 = vector.broadcast %129 : vector<1x128xf32> to vector<32x128xf32>
    %131 = arith.addf %128, %130 : vector<32x128xf32>
    %132 = vector.shape_cast %131 : vector<32x128xf32> to vector<2x16x128xf32>
    %c0_41 = arith.constant 0 : index
    %c0_42 = arith.constant 0 : index
    %c0_43 = arith.constant 0 : index
    %133 = vector.load %arg5[%c0_41, %c0_42, %c0_43] : memref<2x16x128xf32, #tpu.memory_space<vmem>>, vector<2x16x128xf32>
    tpu.vector_store %arg5[%c0_41, %c0_42, %c0_43], %132 {strides = array<i32>} : memref<2x16x128xf32, #tpu.memory_space<vmem>>, vector<2x16x128xf32>,
    return
  }
  func.func @transform_0(%arg0: i32) -> (i32, i32, i32) {
    %c0_i32 = arith.constant 0 : i32
    %c0_i32_0 = arith.constant 0 : i32
    %c0_i32_1 = arith.constant 0 : i32
    return %arg0, %c0_i32, %c0_i32_0 : i32, i32, i32
  }
  func.func @transform_1(%arg0: i32) -> (i32, i32) {
    %c0_i32 = arith.constant 0 : i32
    %c0_i32_0 = arith.constant 0 : i32
    %c0_i32_1 = arith.constant 0 : i32
    return %c0_i32, %c0_i32_0 : i32, i32
  }
  func.func @transform_2(%arg0: i32) -> (i32, i32) {
    %c0_i32 = arith.constant 0 : i32
    %c0_i32_0 = arith.constant 0 : i32
    %c0_i32_1 = arith.constant 0 : i32
    return %c0_i32, %c0_i32_0 : i32, i32
  }
  func.func @transform_3(%arg0: i32) -> (i32, i32) {
    %c0_i32 = arith.constant 0 : i32
    %c0_i32_0 = arith.constant 0 : i32
    %c0_i32_1 = arith.constant 0 : i32
    return %c0_i32, %c0_i32_0 : i32, i32
  }
  func.func @transform_4(%arg0: i32) -> (i32, i32, i32) {
    %c0_i32 = arith.constant 0 : i32
    %c0_i32_0 = arith.constant 0 : i32
    %c0_i32_1 = arith.constant 0 : i32
    return %arg0, %c0_i32, %c0_i32_0 : i32, i32, i32
  }
}

</mosaic_0001>

<llo_original>
// kernel: attention.1
$region0: #{attention.1}
  #allocation0 [shape = 'u32[]', space=smem, size = 0x4, offset = 0x4, fixed_abs, tag = 'smem constant byte address 0x4 - core index']
  #allocation1 [shape = 'u32[72,128]{1,0:T(1,128)}', space=vmem, size = 0x9000, scoped, tag = 'internal scratch']
  %s0 = inlined_call_operand.vmem [shape: f32[4,16,128], index: 0, kind: input, shape index: {}]
  %s1 = inlined_call_operand.vmem [shape: f32[128,384], index: 1, kind: input, shape index: {}]
  %s2 = inlined_call_operand.vmem [shape: f32[128,128], index: 2, kind: input, shape index: {}]
  %s3 = inlined_call_operand.vmem [shape: f32[1,128], index: 3, kind: input, shape index: {}]
  %s4 = inlined_call_operand.hbm [shape: f32[4,16,128], index: 4, kind: output, shape index: {}]
  %s5 = sld [smem:[#allocation0]]
  $region49: #{attention.1} parent=0
    _
  %s7 = ssub.s32 1, %s5
  %s8 = scalar_select 0, %s7, %s5
  $region1: #{attention.1} parent=0
    #allocation2 [shape = 'u8[32768]{0}', space=vmem, size = 0x8000, scoped, tag = 'output window, operand 0']
    #allocation3 [shape = 's32[2]{0}', space=sflag, size = 0x8, scoped, tag = 'scoped memory for attention.1']
    %9 = vsyncpa [#allocation3], 0
    %s10 = scalar_lea.sflag [#allocation3], 1
    %11 = vsyncpa %s10, 0
    loop: start=0, step=1, limit=4
    $region2: #{attention.1} parent=1 // loop_pre_header
      _
    $region3: #{attention.1} parent=1 // loop_header
      %s13 = sphi 0, %s17
      %p14 = scmp.ge.s32.totalorder %s13, 4
      %s23 = sphi 0, %s25
      %s26 = sphi 0, %s23
      %s27 = sphi 0, %s26
      %s43 = sphi 0, %s27
      %s47 = sphi 0, %s47
      %s49 = sphi 0, %s47
      %s50 = sphi 0, %s49
      %s64 = sphi 0, %s50
      %s68 = sphi 0, %s68
      %s70 = sphi 0, %s68
      %s71 = sphi 0, %s70
      %s85 = sphi 0, %s71
      %s89 = sphi 0, %s89
      %s91 = sphi 0, %s89
      %s92 = sphi 0, %s91
      %s106 = sphi 0, %s92
      %s112 = sphi 0, %s114
      %s115 = sphi 0, %s112
      %s116 = sphi 0, %s115
      %s132 = sphi 0, %s116
    $region4: #{attention.1} parent=1 // loop_header_branch
      %16 = sbr.rel (%p14) target = $region8
    $region5: #{attention.1} parent=1 // loop_body
      %s18 = ssub.s32 %s13, 1
      %s19 = ssub.s32 %s13, 2
      %s20 = sadd.s32 %s13, 1
      %s21 = ssub.s32 %s13, %s20
      %p22 = scmp.eq.s32.totalorder %s21, 0
      %s24 = sadd.s32 %s23, 1
      %s25 = scalar_select %p22, %s23, %s24
      %p28 = pneg %p22
      %p29 = scmp.eq.s32.totalorder %s13, 1
      %p30 = por %p28, %p29
      %p31 = scmp.ne.s32.totalorder %s23, %s26
      %p32 = scmp.eq.s32.totalorder %s13, 0
      %p33 = por %p31, %p32
      %p34 = scmp.ne.s32.totalorder %s23, %s26
      %p35 = scmp.eq.s32.totalorder %s18, 1
      %p36 = por %p34, %p35
      %p37 = scmp.ne.s32.totalorder %s26, %s27
      %p38 = scmp.eq.s32.totalorder %s18, 0
      %p39 = por %p37, %p38
      %p40 = scmp.ne.s32.totalorder %s26, %s27
      %p41 = scmp.eq.s32.totalorder %s19, 1
      %p42 = por %p40, %p41
      %p44 = scmp.ne.s32.totalorder %s27, %s43
      %p45 = scmp.eq.s32.totalorder %s19, 0
      %p46 = por %p44, %p45
      %s48 = sadd.s32 %s47, 1
      %p51 = scmp.eq.s32.totalorder %s13, 1
      %p52 = scmp.ne.s32.totalorder %s47, %s49
      %p53 = scmp.eq.s32.totalorder %s13, 0
      %p54 = por %p52, %p53
      %p55 = scmp.ne.s32.totalorder %s47, %s49
      %p56 = scmp.eq.s32.totalorder %s18, 1
      %p57 = por %p55, %p56
      %p58 = scmp.ne.s32.totalorder %s49, %s50
      %p59 = scmp.eq.s32.totalorder %s18, 0
      %p60 = por %p58, %p59
      %p61 = scmp.ne.s32.totalorder %s49, %s50
      %p62 = scmp.eq.s32.totalorder %s19, 1
      %p63 = por %p61, %p62
      %p65 = scmp.ne.s32.totalorder %s50, %s64
      %p66 = scmp.eq.s32.totalorder %s19, 0
      %p67 = por %p65, %p66
      %s69 = sadd.s32 %s68, 1
      %p72 = scmp.eq.s32.totalorder %s13, 1
      %p73 = scmp.ne.s32.totalorder %s68, %s70
      %p74 = scmp.eq.s32.totalorder %s13, 0
      %p75 = por %p73, %p74
      %p76 = scmp.ne.s32.totalorder %s68, %s70
      %p77 = scmp.eq.s32.totalorder %s18, 1
      %p78 = por %p76, %p77
      %p79 = scmp.ne.s32.totalorder %s70, %s71
      %p80 = scmp.eq.s32.totalorder %s18, 0
      %p81 = por %p79, %p80
      %p82 = scmp.ne.s32.totalorder %s70, %s71
      %p83 = scmp.eq.s32.totalorder %s19, 1
      %p84 = por %p82, %p83
      %p86 = scmp.ne.s32.totalorder %s71, %s85
      %p87 = scmp.eq.s32.totalorder %s19, 0
      %p88 = por %p86, %p87
      %s90 = sadd.s32 %s89, 1
      %p93 = scmp.eq.s32.totalorder %s13, 1
      %p94 = scmp.ne.s32.totalorder %s89, %s91
      %p95 = scmp.eq.s32.totalorder %s13, 0
      %p96 = por %p94, %p95
      %p97 = scmp.ne.s32.totalorder %s89, %s91
      %p98 = scmp.eq.s32.totalorder %s18, 1
      %p99 = por %p97, %p98
      %p100 = scmp.ne.s32.totalorder %s91, %s92
      %p101 = scmp.eq.s32.totalorder %s18, 0
      %p102 = por %p100, %p101
      %p103 = scmp.ne.s32.totalorder %s91, %s92
      %p104 = scmp.eq.s32.totalorder %s19, 1
      %p105 = por %p103, %p104
      %p107 = scmp.ne.s32.totalorder %s92, %s106
      %p108 = scmp.eq.s32.totalorder %s19, 0
      %p109 = por %p107, %p108
      %s110 = ssub.s32 %s13, %s20
      %p111 = scmp.eq.s32.totalorder %s110, 0
      %s113 = sadd.s32 %s112, 1
      %s114 = scalar_select %p111, %s112, %s113
      %p117 = pneg %p111
      %p118 = scmp.eq.s32.totalorder %s13, 1
      %p119 = por %p117, %p118
      %p120 = scmp.ne.s32.totalorder %s112, %s115
      %p121 = scmp.eq.s32.totalorder %s13, 0
      %p122 = por %p120, %p121
      %p123 = scmp.ne.s32.totalorder %s112, %s115
      %p124 = scmp.eq.s32.totalorder %s18, 1
      %p125 = por %p123, %p124
      %p126 = scmp.ne.s32.totalorder %s115, %s116
      %p127 = scmp.eq.s32.totalorder %s18, 0
      %p128 = por %p126, %p127
      %p129 = scmp.ne.s32.totalorder %s115, %s116
      %p130 = scmp.eq.s32.totalorder %s19, 1
      %p131 = por %p129, %p130
      %p133 = scmp.ne.s32.totalorder %s116, %s132
      %p134 = scmp.eq.s32.totalorder %s19, 0
      %p135 = por %p133, %p134
      %p136 = scmp.le.s32.totalorder 1, %s13
      %p137 = scmp.lt.s32.totalorder %s13, 3
      %p138 = pnand %p136, %p137
      %p139 = pneg %p138
      // Predicated region
      $region9: #{attention.1} parent=5 // pred_check
        _
      $region10: #{attention.1} parent=5 // pred_check_branch
        %141 = sbr.rel (%p138) target = $region12
      $region11: #{attention.1} parent=5 // pred_region
        %s142 = ssub.s32 %s13, 1
        // Predicated region
        $region13: #{attention.1} parent=11 // pred_check
          %p143 = pneg %p60
        $region14: #{attention.1} parent=11 // pred_check_branch
          %145 = sbr.rel (%p143) target = $region16
        $region15: #{attention.1} parent=11 // pred_region
          _
        $region16: #{attention.1} parent=11 // pred_fallthru
          _
        // Predicated region
        $region17: #{attention.1} parent=11 // pred_check
          %p146 = pneg %p81
        $region18: #{attention.1} parent=11 // pred_check_branch
          %148 = sbr.rel (%p146) target = $region20
        $region19: #{attention.1} parent=11 // pred_region
          _
        $region20: #{attention.1} parent=11 // pred_fallthru
          _
        // Predicated region
        $region21: #{attention.1} parent=11 // pred_check
          %p149 = pneg %p102
        $region22: #{attention.1} parent=11 // pred_check_branch
          %151 = sbr.rel (%p149) target = $region24
        $region23: #{attention.1} parent=11 // pred_region
          _
        $region24: #{attention.1} parent=11 // pred_fallthru
          _
      $region12: #{attention.1} parent=5 // pred_fallthru
        _
      %p152 = scmp.lt.s32.totalorder %s13, 2
      // Predicated region
      $region25: #{attention.1} parent=5 // pred_check
        %p153 = pneg %p152
      $region26: #{attention.1} parent=5 // pred_check_branch
        %155 = sbr.rel (%p153) target = $region28
      $region27: #{attention.1} parent=5 // pred_region
        // Predicated region
        $region29: #{attention.1} parent=27 // pred_check
          %p156 = pneg %p33
        $region30: #{attention.1} parent=27 // pred_check_branch
          %158 = sbr.rel (%p156) target = $region32
        $region31: #{attention.1} parent=27 // pred_region
          %s159 = smul.u32 2, %s13
          %p160 = scmp.lt.s32.totalorder %s159, 3
          %s161 = scalar_select %p160, %s159, 3
          %s162 = smul.addr %s161, 2
          %s163 = smul.addr %s162, 8
          %s164 = scalar_lea.vmem %s0, %s163
          %s165 = smul.u32 2, %s13
        $region32: #{attention.1} parent=27 // pred_fallthru
          _
      $region28: #{attention.1} parent=5 // pred_fallthru
        _
      %p166 = scmp.le.s32.totalorder 1, %s13
      %p167 = scmp.lt.s32.totalorder %s13, 3
      %p168 = pnand %p166, %p167
      %p169 = pneg %p168
      // Predicated region
      $region33: #{attention.1} parent=5 // pred_check
        _
      $region34: #{attention.1} parent=5 // pred_check_branch
        %171 = sbr.rel (%p168) target = $region36
      $region35: #{attention.1} parent=5 // pred_region
        %s172 = ssub.s32 %s13, 1
        %s173 = smul.u32 2, %s18
        %p174 = scmp.lt.s32.totalorder %s173, 3
        %s175 = scalar_select %p174, %s173, 3
        %s176 = smul.addr %s175, 2
        %s177 = smul.addr %s176, 8
        %s178 = scalar_lea.vmem %s0, %s177
        %p179 = pneg %p39
        %p180 = pneg %p36
        %p181 = pneg %p60
        %p182 = pneg %p57
        %p183 = pneg %p81
        %p184 = pneg %p78
        %p185 = pneg %p102
        %p186 = pneg %p99
        %p187 = pneg %p128
        %p188 = pneg %p125
        %s189 = sand.u32 %s115, 1
        %s190 = scalar_lea.sflag [#allocation3], %s189
        %s191 = sand.u32 %s115, 1
        %s192 = smul.addr %s191, 32
        %s193 = scalar_lea.vmem [#allocation2], %s192
        %s194 = smul.u32 2, %s18
        %p195 = scmp.lt.s32.totalorder %s194, 3
        %s196 = scalar_select %p195, %s194, 3
        %s197 = smul.addr %s196, 2
        %s198 = smul.addr %s197, 8
        %s199 = scalar_lea.vmem %s0, %s198
        %s200 = smul.u32 2, %s18
        %s201 = smul.u32 2, %s18
        %v202 = vld [vmem:[%s199] sm:$0xff]
        %v203 = vld [vmem:[%s199 + $0x8] sm:$0xff]
        %v204 = vld [vmem:[%s199 + $0x10] sm:$0xff]
        %v205 = vld [vmem:[%s199 + $0x18] sm:$0xff]
        %v206 = vld [vmem:[%s1] sm:$0xff]
        %v207 = vld [vmem:[%s1 + $0x8] sm:$0xff]
        %v208 = vld [vmem:[%s1 + $0x10] sm:$0xff]
        %v209 = vld [vmem:[%s1 + $0x18] sm:$0xff]
        %v210 = vld [vmem:[%s1 + $0x20] sm:$0xff]
        %v211 = vld [vmem:[%s1 + $0x28] sm:$0xff]
        %v212 = vld [vmem:[%s1 + $0x30] sm:$0xff]
        %v213 = vld [vmem:[%s1 + $0x38] sm:$0xff]
        %v214 = vld [vmem:[%s1 + $0x40] sm:$0xff]
        %v215 = vld [vmem:[%s1 + $0x48] sm:$0xff]
        %v216 = vld [vmem:[%s1 + $0x50] sm:$0xff]
        %v217 = vld [vmem:[%s1 + $0x58] sm:$0xff]
        %v218 = vld [vmem:[%s1 + $0x60] sm:$0xff]
        %v219 = vld [vmem:[%s1 + $0x68] sm:$0xff]
        %v220 = vld [vmem:[%s1 + $0x70] sm:$0xff]
        %v221 = vld [vmem:[%s1 + $0x78] sm:$0xff]
        %v222 = vld [vmem:[%s1 + $0x80] sm:$0xff]
        %v223 = vld [vmem:[%s1 + $0x88] sm:$0xff]
        %v224 = vld [vmem:[%s1 + $0x90] sm:$0xff]
        %v225 = vld [vmem:[%s1 + $0x98] sm:$0xff]
        %v226 = vld [vmem:[%s1 + $0xa0] sm:$0xff]
        %v227 = vld [vmem:[%s1 + $0xa8] sm:$0xff]
        %v228 = vld [vmem:[%s1 + $0xb0] sm:$0xff]
        %v229 = vld [vmem:[%s1 + $0xb8] sm:$0xff]
        %v230 = vld [vmem:[%s1 + $0xc0] sm:$0xff]
        %v231 = vld [vmem:[%s1 + $0xc8] sm:$0xff]
        %v232 = vld [vmem:[%s1 + $0xd0] sm:$0xff]
        %v233 = vld [vmem:[%s1 + $0xd8] sm:$0xff]
        %v234 = vld [vmem:[%s1 + $0xe0] sm:$0xff]
        %v235 = vld [vmem:[%s1 + $0xe8] sm:$0xff]
        %v236 = vld [vmem:[%s1 + $0xf0] sm:$0xff]
        %v237 = vld [vmem:[%s1 + $0xf8] sm:$0xff]
        %v238 = vld [vmem:[%s1 + $0x100] sm:$0xff]
        %v239 = vld [vmem:[%s1 + $0x108] sm:$0xff]
        %v240 = vld [vmem:[%s1 + $0x110] sm:$0xff]
        %v241 = vld [vmem:[%s1 + $0x118] sm:$0xff]
        %v242 = vld [vmem:[%s1 + $0x120] sm:$0xff]
        %v243 = vld [vmem:[%s1 + $0x128] sm:$0xff]
        %v244 = vld [vmem:[%s1 + $0x130] sm:$0xff]
        %v245 = vld [vmem:[%s1 + $0x138] sm:$0xff]
        %v246 = vld [vmem:[%s1 + $0x140] sm:$0xff]
        %v247 = vld [vmem:[%s1 + $0x148] sm:$0xff]
        %v248 = vld [vmem:[%s1 + $0x150] sm:$0xff]
        %v249 = vld [vmem:[%s1 + $0x158] sm:$0xff]
        %v250 = vld [vmem:[%s1 + $0x160] sm:$0xff]
        %v251 = vld [vmem:[%s1 + $0x168] sm:$0xff]
        %v252 = vld [vmem:[%s1 + $0x170] sm:$0xff]
        %v253 = vld [vmem:[%s1 + $0x178] sm:$0xff]
        %254 = vmatpush.msra.mxu0 %v251
        %255 = vmatpush.msra.mxu0 %v248
        %256 = vmatpush.msra.mxu0 %v245
        %257 = vmatpush.msra.mxu0 %v242
        %258 = vmatpush.msra.mxu0 %v239
        %259 = vmatpush.msra.mxu0 %v236
        %260 = vmatpush.msra.mxu0 %v233
        %261 = vmatpush.msra.mxu0 %v230
        %262 = vmatpush.msra.mxu0 %v227
        %263 = vmatpush.msra.mxu0 %v224
        %264 = vmatpush.msra.mxu0 %v221
        %265 = vmatpush.msra.mxu0 %v218
        %266 = vmatpush.msra.mxu0 %v215
        %267 = vmatpush.msra.mxu0 %v212
        %268 = vmatpush.msra.mxu0 %v209
        %269 = vmatpush.msra.mxu0 %v206
        %270 = vmatmul.f32.gmra.mxu0 %v202
        %v271 = vpop.f32.mrf.mxu0
        %v272 = vadd.f32 0.0, %v271
        %273 = vmatmul.f32.gmra.mxu0 %v203
        %v274 = vpop.f32.mrf.mxu0
        %v275 = vadd.f32 0.0, %v274
        %276 = vmatmul.f32.gmra.mxu0 %v204
        %v277 = vpop.f32.mrf.mxu0
        %v278 = vadd.f32 0.0, %v277
        %279 = vmatmul.f32.gmra.mxu0 %v205
        %v280 = vpop.f32.mrf.mxu0
        %v281 = vadd.f32 0.0, %v280
        %282 = vdwg.mxu0
        %283 = vmatpush.msra.mxu0 %v252
        %284 = vmatpush.msra.mxu0 %v249
        %285 = vmatpush.msra.mxu0 %v246
        %286 = vmatpush.msra.mxu0 %v243
        %287 = vmatpush.msra.mxu0 %v240
        %288 = vmatpush.msra.mxu0 %v237
        %289 = vmatpush.msra.mxu0 %v234
        %290 = vmatpush.msra.mxu0 %v231
        %291 = vmatpush.msra.mxu0 %v228
        %292 = vmatpush.msra.mxu0 %v225
        %293 = vmatpush.msra.mxu0 %v222
        %294 = vmatpush.msra.mxu0 %v219
        %295 = vmatpush.msra.mxu0 %v216
        %296 = vmatpush.msra.mxu0 %v213
        %297 = vmatpush.msra.mxu0 %v210
        %298 = vmatpush.msra.mxu0 %v207
        %299 = vmatmul.f32.gmra.mxu0 %v202
        %v300 = vpop.f32.mrf.mxu0
        %v301 = vadd.f32 0.0, %v300
        %302 = vmatmul.f32.gmra.mxu0 %v203
        %v303 = vpop.f32.mrf.mxu0
        %v304 = vadd.f32 0.0, %v303
        %305 = vmatmul.f32.gmra.mxu0 %v204
        %v306 = vpop.f32.mrf.mxu0
        %v307 = vadd.f32 0.0, %v306
        %308 = vmatmul.f32.gmra.mxu0 %v205
        %v309 = vpop.f32.mrf.mxu0
        %v310 = vadd.f32 0.0, %v309
        %311 = vdwg.mxu0
        %312 = vmatpush.msra.mxu0 %v253
        %313 = vmatpush.msra.mxu0 %v250
        %314 = vmatpush.msra.mxu0 %v247
        %315 = vmatpush.msra.mxu0 %v244
        %316 = vmatpush.msra.mxu0 %v241
        %317 = vmatpush.msra.mxu0 %v238
        %318 = vmatpush.msra.mxu0 %v235
        %319 = vmatpush.msra.mxu0 %v232
        %320 = vmatpush.msra.mxu0 %v229
        %321 = vmatpush.msra.mxu0 %v226
        %322 = vmatpush.msra.mxu0 %v223
        %323 = vmatpush.msra.mxu0 %v220
        %324 = vmatpush.msra.mxu0 %v217
        %325 = vmatpush.msra.mxu0 %v214
        %326 = vmatpush.msra.mxu0 %v211
        %327 = vmatpush.msra.mxu0 %v208
        %328 = vmatmul.f32.gmra.mxu0 %v202
        %v329 = vpop.f32.mrf.mxu0
        %v330 = vadd.f32 0.0, %v329
        %331 = vmatmul.f32.gmra.mxu0 %v203
        %v332 = vpop.f32.mrf.mxu0
        %v333 = vadd.f32 0.0, %v332
        %334 = vmatmul.f32.gmra.mxu0 %v204
        %v335 = vpop.f32.mrf.mxu0
        %v336 = vadd.f32 0.0, %v335
        %337 = vmatmul.f32.gmra.mxu0 %v205
        %v338 = vpop.f32.mrf.mxu0
        %v339 = vadd.f32 0.0, %v338
        %340 = vdwg.mxu0
        %vm341 = vcmask 261120
        %v343 = vsel %vm341, %v272, 0
        %v346 = vsel %vm341, %v275, 0
        %v349 = vsel %vm341, %v301, 0
        %v352 = vsel %vm341, %v304, 0
        %354 = vmatpush.xpose.msra.mxu0 0.0
        %355 = vmatpush.xpose.msra.mxu0 0.0
        %356 = vmatpush.xpose.msra.mxu0 0.0
        %357 = vmatpush.xpose.msra.mxu0 0.0
        %358 = vmatpush.xpose.msra.mxu0 0.0
        %359 = vmatpush.xpose.msra.mxu0 0.0
        %360 = vmatpush.xpose.msra.mxu0 0.0
        %361 = vmatpush.xpose.msra.mxu0 0.0
        %362 = vmatpush.xpose.msra.mxu0 0.0
        %363 = vmatpush.xpose.msra.mxu0 0.0
        %364 = vmatpush.xpose.msra.mxu0 0.0
        %365 = vmatpush.xpose.msra.mxu0 0.0
        %366 = vmatpush.xpose.msra.mxu0 0.0
        %367 = vmatpush.xpose.msra.mxu0 0.0
        %368 = vmatpush.xpose.msra.mxu0 %v352
        %369 = vmatpush.xpose.msra.mxu0 %v349
        %370 = vmatmul.f32.gmra.mxu0 %v343
        %v371 = vpop.f32.mrf.mxu0
        %v372 = vadd.f32 0.0, %v371
        %373 = vmatmul.f32.gmra.mxu0 %v346
        %v374 = vpop.f32.mrf.mxu0
        %v375 = vadd.f32 0.0, %v374
        %376 = vdwg.mxu0
        %vm377 = vcmask 130048
        %v378 = vsel %vm377, %v372, -inf
        %379 = vmax.xlane.f32.xlu0 %v378
        %v380 = vpop.xlane.xlu0 %379
        %v381 = vsel %vm377, %v375, -inf
        %382 = vmax.xlane.f32.xlu0 %v381
        %v383 = vpop.xlane.xlu0 %382
        %v384 = vsub.f32 %v372, %v380
        %v385 = vsub.f32 %v375, %v383
        %v386 = vmul.f32 %v384, 1.442695
        %v387 = vpow.pop %v386
        %v388 = vmul.f32 %v385, 1.442695
        %v389 = vpow.pop %v388
        %v390 = vsel %vm377, %v387, 0.0
        %391 = vadd.xlane.f32.xlu0 %v390
        %v392 = vpop.xlane.xlu0 %391
        %v393 = vsel %vm377, %v389, 0.0
        %394 = vadd.xlane.f32.xlu0 %v393
        %v395 = vpop.xlane.xlu0 %394
        %v397 = vsel %vm377, %v387, 0
        %v400 = vsel %vm377, %v389, 0
        %402 = vmatpush.msra.mxu0 0.0
        %403 = vmatpush.msra.mxu0 0.0
        %404 = vmatpush.msra.mxu0 0.0
        %405 = vmatpush.msra.mxu0 0.0
        %406 = vmatpush.msra.mxu0 0.0
        %407 = vmatpush.msra.mxu0 0.0
        %408 = vmatpush.msra.mxu0 0.0
        %409 = vmatpush.msra.mxu0 0.0
        %410 = vmatpush.msra.mxu0 0.0
        %411 = vmatpush.msra.mxu0 0.0
        %412 = vmatpush.msra.mxu0 0.0
        %413 = vmatpush.msra.mxu0 0.0
        %414 = vmatpush.msra.mxu0 0.0
        %415 = vmatpush.msra.mxu0 0.0
        %416 = vmatpush.msra.mxu0 %v333
        %417 = vmatpush.msra.mxu0 %v330
        %418 = vmatmul.f32.gmra.mxu0 %v397
        %v419 = vpop.f32.mrf.mxu0
        %v420 = vadd.f32 0.0, %v419
        %421 = vmatmul.f32.gmra.mxu0 %v400
        %v422 = vpop.f32.mrf.mxu0
        %v423 = vadd.f32 0.0, %v422
        %424 = vdwg.mxu0
        %v425 = vrcp.pop %v392
        %v426 = vrcp.pop %v395
        %v427 = vmul.f32 %v420, %v425
        %v428 = vmul.f32 %v423, %v426
        %429 = vrot.lane.b32.xlu0 %v272, 96
        %v430 = vpop.permute.xlu0 %429
        %431 = vrot.lane.b32.xlu0 %v275, 96
        %v432 = vpop.permute.xlu0 %431
        %433 = vrot.lane.b32.xlu0 %v301, 96
        %v434 = vpop.permute.xlu0 %433
        %435 = vrot.lane.b32.xlu0 %v304, 96
        %v436 = vpop.permute.xlu0 %435
        %v437 = vsel %vm341, %v430, 0
        %v439 = vsel %vm341, %v432, 0
        %v441 = vsel %vm341, %v434, 0
        %v443 = vsel %vm341, %v436, 0
        %445 = vmatpush.xpose.msra.mxu0 0.0
        %446 = vmatpush.xpose.msra.mxu0 0.0
        %447 = vmatpush.xpose.msra.mxu0 0.0
        %448 = vmatpush.xpose.msra.mxu0 0.0
        %449 = vmatpush.xpose.msra.mxu0 0.0
        %450 = vmatpush.xpose.msra.mxu0 0.0
        %451 = vmatpush.xpose.msra.mxu0 0.0
        %452 = vmatpush.xpose.msra.mxu0 0.0
        %453 = vmatpush.xpose.msra.mxu0 0.0
        %454 = vmatpush.xpose.msra.mxu0 0.0
        %455 = vmatpush.xpose.msra.mxu0 0.0
        %456 = vmatpush.xpose.msra.mxu0 0.0
        %457 = vmatpush.xpose.msra.mxu0 0.0
        %458 = vmatpush.xpose.msra.mxu0 0.0
        %459 = vmatpush.xpose.msra.mxu0 %v443
        %460 = vmatpush.xpose.msra.mxu0 %v441
        %461 = vmatmul.f32.gmra.mxu0 %v437
        %v462 = vpop.f32.mrf.mxu0
        %v463 = vadd.f32 0.0, %v462
        %464 = vmatmul.f32.gmra.mxu0 %v439
        %v465 = vpop.f32.mrf.mxu0
        %v466 = vadd.f32 0.0, %v465
        %467 = vdwg.mxu0
        %v468 = vsel %vm377, %v463, -inf
        %469 = vmax.xlane.f32.xlu0 %v468
        %v470 = vpop.xlane.xlu0 %469
        %v471 = vsel %vm377, %v466, -inf
        %472 = vmax.xlane.f32.xlu0 %v471
        %v473 = vpop.xlane.xlu0 %472
        %v474 = vsub.f32 %v463, %v470
        %v475 = vsub.f32 %v466, %v473
        %v476 = vmul.f32 %v474, 1.442695
        %v477 = vpow.pop %v476
        %v478 = vmul.f32 %v475, 1.442695
        %v479 = vpow.pop %v478
        %v480 = vsel %vm377, %v477, 0.0
        %481 = vadd.xlane.f32.xlu0 %v480
        %v482 = vpop.xlane.xlu0 %481
        %v483 = vsel %vm377, %v479, 0.0
        %484 = vadd.xlane.f32.xlu0 %v483
        %v485 = vpop.xlane.xlu0 %484
        %488 = vrot.lane.b32.xlu0 %v330, 96
        %v489 = vpop.permute.xlu0 %488
        %490 = vrot.lane.b32.xlu0 %v333, 96
        %v491 = vpop.permute.xlu0 %490
        %v495 = vsel %vm377, %v477, 0
        %v498 = vsel %vm377, %v479, 0
        %500 = vmatpush.msra.mxu0 0.0
        %501 = vmatpush.msra.mxu0 0.0
        %502 = vmatpush.msra.mxu0 0.0
        %503 = vmatpush.msra.mxu0 0.0
        %504 = vmatpush.msra.mxu0 0.0
        %505 = vmatpush.msra.mxu0 0.0
        %506 = vmatpush.msra.mxu0 0.0
        %507 = vmatpush.msra.mxu0 0.0
        %508 = vmatpush.msra.mxu0 0.0
        %509 = vmatpush.msra.mxu0 0.0
        %510 = vmatpush.msra.mxu0 0.0
        %511 = vmatpush.msra.mxu0 0.0
        %512 = vmatpush.msra.mxu0 0.0
        %513 = vmatpush.msra.mxu0 0.0
        %514 = vmatpush.msra.mxu0 %v491
        %515 = vmatpush.msra.mxu0 %v489
        %516 = vmatmul.f32.gmra.mxu0 %v495
        %v517 = vpop.f32.mrf.mxu0
        %v518 = vadd.f32 0.0, %v517
        %519 = vmatmul.f32.gmra.mxu0 %v498
        %v520 = vpop.f32.mrf.mxu0
        %v521 = vadd.f32 0.0, %v520
        %522 = vdwg.mxu0
        %v523 = vrcp.pop %v482
        %v524 = vrcp.pop %v485
        %v525 = vmul.f32 %v518, %v523
        %v526 = vmul.f32 %v521, %v524
        %527 = vrot.lane.b32.xlu0 %v272, 64
        %v528 = vpop.permute.xlu0 %527
        %529 = vrot.lane.b32.xlu0 %v275, 64
        %v530 = vpop.permute.xlu0 %529
        %531 = vrot.lane.b32.xlu0 %v301, 64
        %v532 = vpop.permute.xlu0 %531
        %533 = vrot.lane.b32.xlu0 %v304, 64
        %v534 = vpop.permute.xlu0 %533
        %v535 = vsel %vm341, %v528, 0
        %v537 = vsel %vm341, %v530, 0
        %v539 = vsel %vm341, %v532, 0
        %v541 = vsel %vm341, %v534, 0
        %543 = vmatpush.xpose.msra.mxu0 0.0
        %544 = vmatpush.xpose.msra.mxu0 0.0
        %545 = vmatpush.xpose.msra.mxu0 0.0
        %546 = vmatpush.xpose.msra.mxu0 0.0
        %547 = vmatpush.xpose.msra.mxu0 0.0
        %548 = vmatpush.xpose.msra.mxu0 0.0
        %549 = vmatpush.xpose.msra.mxu0 0.0
        %550 = vmatpush.xpose.msra.mxu0 0.0
        %551 = vmatpush.xpose.msra.mxu0 0.0
        %552 = vmatpush.xpose.msra.mxu0 0.0
        %553 = vmatpush.xpose.msra.mxu0 0.0
        %554 = vmatpush.xpose.msra.mxu0 0.0
        %555 = vmatpush.xpose.msra.mxu0 0.0
        %556 = vmatpush.xpose.msra.mxu0 0.0
        %557 = vmatpush.xpose.msra.mxu0 %v541
        %558 = vmatpush.xpose.msra.mxu0 %v539
        %559 = vmatmul.f32.gmra.mxu0 %v535
        %v560 = vpop.f32.mrf.mxu0
        %v561 = vadd.f32 0.0, %v560
        %562 = vmatmul.f32.gmra.mxu0 %v537
        %v563 = vpop.f32.mrf.mxu0
        %v564 = vadd.f32 0.0, %v563
        %565 = vdwg.mxu0
        %v566 = vsel %vm377, %v561, -inf
        %567 = vmax.xlane.f32.xlu0 %v566
        %v568 = vpop.xlane.xlu0 %567
        %v569 = vsel %vm377, %v564, -inf
        %570 = vmax.xlane.f32.xlu0 %v569
        %v571 = vpop.xlane.xlu0 %570
        %v572 = vsub.f32 %v561, %v568
        %v573 = vsub.f32 %v564, %v571
        %v574 = vmul.f32 %v572, 1.442695
        %v575 = vpow.pop %v574
        %v576 = vmul.f32 %v573, 1.442695
        %v577 = vpow.pop %v576
        %v578 = vsel %vm377, %v575, 0.0
        %579 = vadd.xlane.f32.xlu0 %v578
        %v580 = vpop.xlane.xlu0 %579
        %v581 = vsel %vm377, %v577, 0.0
        %582 = vadd.xlane.f32.xlu0 %v581
        %v583 = vpop.xlane.xlu0 %582
        %584 = vrot.lane.b32.xlu0 %v330, 64
        %v585 = vpop.permute.xlu0 %584
        %586 = vrot.lane.b32.xlu0 %v333, 64
        %v587 = vpop.permute.xlu0 %586
        %v591 = vsel %vm377, %v575, 0
        %v594 = vsel %vm377, %v577, 0
        %596 = vmatpush.msra.mxu0 0.0
        %597 = vmatpush.msra.mxu0 0.0
        %598 = vmatpush.msra.mxu0 0.0
        %599 = vmatpush.msra.mxu0 0.0
        %600 = vmatpush.msra.mxu0 0.0
        %601 = vmatpush.msra.mxu0 0.0
        %602 = vmatpush.msra.mxu0 0.0
        %603 = vmatpush.msra.mxu0 0.0
        %604 = vmatpush.msra.mxu0 0.0
        %605 = vmatpush.msra.mxu0 0.0
        %606 = vmatpush.msra.mxu0 0.0
        %607 = vmatpush.msra.mxu0 0.0
        %608 = vmatpush.msra.mxu0 0.0
        %609 = vmatpush.msra.mxu0 0.0
        %610 = vmatpush.msra.mxu0 %v587
        %611 = vmatpush.msra.mxu0 %v585
        %612 = vmatmul.f32.gmra.mxu0 %v591
        %v613 = vpop.f32.mrf.mxu0
        %v614 = vadd.f32 0.0, %v613
        %615 = vmatmul.f32.gmra.mxu0 %v594
        %v616 = vpop.f32.mrf.mxu0
        %v617 = vadd.f32 0.0, %v616
        %618 = vdwg.mxu0
        %v619 = vrcp.pop %v580
        %v620 = vrcp.pop %v583
        %v621 = vmul.f32 %v614, %v619
        %v622 = vmul.f32 %v617, %v620
        %623 = vrot.lane.b32.xlu0 %v272, 32
        %v624 = vpop.permute.xlu0 %623
        %625 = vrot.lane.b32.xlu0 %v275, 32
        %v626 = vpop.permute.xlu0 %625
        %627 = vrot.lane.b32.xlu0 %v301, 32
        %v628 = vpop.permute.xlu0 %627
        %629 = vrot.lane.b32.xlu0 %v304, 32
        %v630 = vpop.permute.xlu0 %629
        %v631 = vsel %vm341, %v624, 0
        %v633 = vsel %vm341, %v626, 0
        %v635 = vsel %vm341, %v628, 0
        %v637 = vsel %vm341, %v630, 0
        %639 = vmatpush.xpose.msra.mxu0 0.0
        %640 = vmatpush.xpose.msra.mxu0 0.0
        %641 = vmatpush.xpose.msra.mxu0 0.0
        %642 = vmatpush.xpose.msra.mxu0 0.0
        %643 = vmatpush.xpose.msra.mxu0 0.0
        %644 = vmatpush.xpose.msra.mxu0 0.0
        %645 = vmatpush.xpose.msra.mxu0 0.0
        %646 = vmatpush.xpose.msra.mxu0 0.0
        %647 = vmatpush.xpose.msra.mxu0 0.0
        %648 = vmatpush.xpose.msra.mxu0 0.0
        %649 = vmatpush.xpose.msra.mxu0 0.0
        %650 = vmatpush.xpose.msra.mxu0 0.0
        %651 = vmatpush.xpose.msra.mxu0 0.0
        %652 = vmatpush.xpose.msra.mxu0 0.0
        %653 = vmatpush.xpose.msra.mxu0 %v637
        %654 = vmatpush.xpose.msra.mxu0 %v635
        %655 = vmatmul.f32.gmra.mxu0 %v631
        %v656 = vpop.f32.mrf.mxu0
        %v657 = vadd.f32 0.0, %v656
        %658 = vmatmul.f32.gmra.mxu0 %v633
        %v659 = vpop.f32.mrf.mxu0
        %v660 = vadd.f32 0.0, %v659
        %661 = vdwg.mxu0
        %v662 = vsel %vm377, %v657, -inf
        %663 = vmax.xlane.f32.xlu0 %v662
        %v664 = vpop.xlane.xlu0 %663
        %v665 = vsel %vm377, %v660, -inf
        %666 = vmax.xlane.f32.xlu0 %v665
        %v667 = vpop.xlane.xlu0 %666
        %v668 = vsub.f32 %v657, %v664
        %v669 = vsub.f32 %v660, %v667
        %v670 = vmul.f32 %v668, 1.442695
        %v671 = vpow.pop %v670
        %v672 = vmul.f32 %v669, 1.442695
        %v673 = vpow.pop %v672
        %v674 = vsel %vm377, %v671, 0.0
        %675 = vadd.xlane.f32.xlu0 %v674
        %v676 = vpop.xlane.xlu0 %675
        %v677 = vsel %vm377, %v673, 0.0
        %678 = vadd.xlane.f32.xlu0 %v677
        %v679 = vpop.xlane.xlu0 %678
        %680 = vrot.lane.b32.xlu0 %v330, 32
        %v681 = vpop.permute.xlu0 %680
        %682 = vrot.lane.b32.xlu0 %v333, 32
        %v683 = vpop.permute.xlu0 %682
        %v687 = vsel %vm377, %v671, 0
        %v690 = vsel %vm377, %v673, 0
        %692 = vmatpush.msra.mxu0 0.0
        %693 = vmatpush.msra.mxu0 0.0
        %694 = vmatpush.msra.mxu0 0.0
        %695 = vmatpush.msra.mxu0 0.0
        %696 = vmatpush.msra.mxu0 0.0
        %697 = vmatpush.msra.mxu0 0.0
        %698 = vmatpush.msra.mxu0 0.0
        %699 = vmatpush.msra.mxu0 0.0
        %700 = vmatpush.msra.mxu0 0.0
        %701 = vmatpush.msra.mxu0 0.0
        %702 = vmatpush.msra.mxu0 0.0
        %703 = vmatpush.msra.mxu0 0.0
        %704 = vmatpush.msra.mxu0 0.0
        %705 = vmatpush.msra.mxu0 0.0
        %706 = vmatpush.msra.mxu0 %v683
        %707 = vmatpush.msra.mxu0 %v681
        %708 = vmatmul.f32.gmra.mxu0 %v687
        %v709 = vpop.f32.mrf.mxu0
        %v710 = vadd.f32 0.0, %v709
        %711 = vmatmul.f32.gmra.mxu0 %v690
        %v712 = vpop.f32.mrf.mxu0
        %v713 = vadd.f32 0.0, %v712
        %714 = vdwg.mxu0
        %v715 = vrcp.pop %v676
        %v716 = vrcp.pop %v679
        %v717 = vmul.f32 %v710, %v715
        %v718 = vmul.f32 %v713, %v716
        %721 = vrot.lane.b32.xlu0 %v525, 32
        %v722 = vpop.permute.xlu0 %721
        %723 = vrot.lane.b32.xlu0 %v526, 32
        %v724 = vpop.permute.xlu0 %723
        %729 = vrot.lane.b32.xlu0 %v621, 64
        %v730 = vpop.permute.xlu0 %729
        %731 = vrot.lane.b32.xlu0 %v622, 64
        %v732 = vpop.permute.xlu0 %731
        %737 = vrot.lane.b32.xlu0 %v717, 96
        %v738 = vpop.permute.xlu0 %737
        %739 = vrot.lane.b32.xlu0 %v718, 96
        %v740 = vpop.permute.xlu0 %739
        %v743 = vsel %vm341, %v427, %v722
        %v744 = vsel %vm341, %v428, %v724
        %vm745 = vcmask 523264
        %v746 = vsel %vm745, %v743, %v730
        %v747 = vsel %vm745, %v744, %v732
        %vm748 = vcmask 785408
        %v749 = vsel %vm748, %v746, %v738
        %v750 = vsel %vm748, %v747, %v740
        %v752 = vsel %vm341, %v278, 0
        %v755 = vsel %vm341, %v281, 0
        %v758 = vsel %vm341, %v307, 0
        %v761 = vsel %vm341, %v310, 0
        %763 = vmatpush.xpose.msra.mxu0 0.0
        %764 = vmatpush.xpose.msra.mxu0 0.0
        %765 = vmatpush.xpose.msra.mxu0 0.0
        %766 = vmatpush.xpose.msra.mxu0 0.0
        %767 = vmatpush.xpose.msra.mxu0 0.0
        %768 = vmatpush.xpose.msra.mxu0 0.0
        %769 = vmatpush.xpose.msra.mxu0 0.0
        %770 = vmatpush.xpose.msra.mxu0 0.0
        %771 = vmatpush.xpose.msra.mxu0 0.0
        %772 = vmatpush.xpose.msra.mxu0 0.0
        %773 = vmatpush.xpose.msra.mxu0 0.0
        %774 = vmatpush.xpose.msra.mxu0 0.0
        %775 = vmatpush.xpose.msra.mxu0 0.0
        %776 = vmatpush.xpose.msra.mxu0 0.0
        %777 = vmatpush.xpose.msra.mxu0 %v761
        %778 = vmatpush.xpose.msra.mxu0 %v758
        %779 = vmatmul.f32.gmra.mxu0 %v752
        %v780 = vpop.f32.mrf.mxu0
        %v781 = vadd.f32 0.0, %v780
        %782 = vmatmul.f32.gmra.mxu0 %v755
        %v783 = vpop.f32.mrf.mxu0
        %v784 = vadd.f32 0.0, %v783
        %785 = vdwg.mxu0
        %v786 = vsel %vm377, %v781, -inf
        %787 = vmax.xlane.f32.xlu0 %v786
        %v788 = vpop.xlane.xlu0 %787
        %v789 = vsel %vm377, %v784, -inf
        %790 = vmax.xlane.f32.xlu0 %v789
        %v791 = vpop.xlane.xlu0 %790
        %v792 = vsub.f32 %v781, %v788
        %v793 = vsub.f32 %v784, %v791
        %v794 = vmul.f32 %v792, 1.442695
        %v795 = vpow.pop %v794
        %v796 = vmul.f32 %v793, 1.442695
        %v797 = vpow.pop %v796
        %v798 = vsel %vm377, %v795, 0.0
        %799 = vadd.xlane.f32.xlu0 %v798
        %v800 = vpop.xlane.xlu0 %799
        %v801 = vsel %vm377, %v797, 0.0
        %802 = vadd.xlane.f32.xlu0 %v801
        %v803 = vpop.xlane.xlu0 %802
        %v805 = vsel %vm377, %v795, 0
        %v808 = vsel %vm377, %v797, 0
        %810 = vmatpush.msra.mxu0 0.0
        %811 = vmatpush.msra.mxu0 0.0
        %812 = vmatpush.msra.mxu0 0.0
        %813 = vmatpush.msra.mxu0 0.0
        %814 = vmatpush.msra.mxu0 0.0
        %815 = vmatpush.msra.mxu0 0.0
        %816 = vmatpush.msra.mxu0 0.0
        %817 = vmatpush.msra.mxu0 0.0
        %818 = vmatpush.msra.mxu0 0.0
        %819 = vmatpush.msra.mxu0 0.0
        %820 = vmatpush.msra.mxu0 0.0
        %821 = vmatpush.msra.mxu0 0.0
        %822 = vmatpush.msra.mxu0 0.0
        %823 = vmatpush.msra.mxu0 0.0
        %824 = vmatpush.msra.mxu0 %v339
        %825 = vmatpush.msra.mxu0 %v336
        %826 = vmatmul.f32.gmra.mxu0 %v805
        %v827 = vpop.f32.mrf.mxu0
        %v828 = vadd.f32 0.0, %v827
        %829 = vmatmul.f32.gmra.mxu0 %v808
        %v830 = vpop.f32.mrf.mxu0
        %v831 = vadd.f32 0.0, %v830
        %832 = vdwg.mxu0
        %v833 = vrcp.pop %v800
        %v834 = vrcp.pop %v803
        %v835 = vmul.f32 %v828, %v833
        %v836 = vmul.f32 %v831, %v834
        %837 = vrot.lane.b32.xlu0 %v278, 96
        %v838 = vpop.permute.xlu0 %837
        %839 = vrot.lane.b32.xlu0 %v281, 96
        %v840 = vpop.permute.xlu0 %839
        %841 = vrot.lane.b32.xlu0 %v307, 96
        %v842 = vpop.permute.xlu0 %841
        %843 = vrot.lane.b32.xlu0 %v310, 96
        %v844 = vpop.permute.xlu0 %843
        %v845 = vsel %vm341, %v838, 0
        %v847 = vsel %vm341, %v840, 0
        %v849 = vsel %vm341, %v842, 0
        %v851 = vsel %vm341, %v844, 0
        %853 = vmatpush.xpose.msra.mxu0 0.0
        %854 = vmatpush.xpose.msra.mxu0 0.0
        %855 = vmatpush.xpose.msra.mxu0 0.0
        %856 = vmatpush.xpose.msra.mxu0 0.0
        %857 = vmatpush.xpose.msra.mxu0 0.0
        %858 = vmatpush.xpose.msra.mxu0 0.0
        %859 = vmatpush.xpose.msra.mxu0 0.0
        %860 = vmatpush.xpose.msra.mxu0 0.0
        %861 = vmatpush.xpose.msra.mxu0 0.0
        %862 = vmatpush.xpose.msra.mxu0 0.0
        %863 = vmatpush.xpose.msra.mxu0 0.0
        %864 = vmatpush.xpose.msra.mxu0 0.0
        %865 = vmatpush.xpose.msra.mxu0 0.0
        %866 = vmatpush.xpose.msra.mxu0 0.0
        %867 = vmatpush.xpose.msra.mxu0 %v851
        %868 = vmatpush.xpose.msra.mxu0 %v849
        %869 = vmatmul.f32.gmra.mxu0 %v845
        %v870 = vpop.f32.mrf.mxu0
        %v871 = vadd.f32 0.0, %v870
        %872 = vmatmul.f32.gmra.mxu0 %v847
        %v873 = vpop.f32.mrf.mxu0
        %v874 = vadd.f32 0.0, %v873
        %875 = vdwg.mxu0
        %v876 = vsel %vm377, %v871, -inf
        %877 = vmax.xlane.f32.xlu0 %v876
        %v878 = vpop.xlane.xlu0 %877
        %v879 = vsel %vm377, %v874, -inf
        %880 = vmax.xlane.f32.xlu0 %v879
        %v881 = vpop.xlane.xlu0 %880
        %v882 = vsub.f32 %v871, %v878
        %v883 = vsub.f32 %v874, %v881
        %v884 = vmul.f32 %v882, 1.442695
        %v885 = vpow.pop %v884
        %v886 = vmul.f32 %v883, 1.442695
        %v887 = vpow.pop %v886
        %v888 = vsel %vm377, %v885, 0.0
        %889 = vadd.xlane.f32.xlu0 %v888
        %v890 = vpop.xlane.xlu0 %889
        %v891 = vsel %vm377, %v887, 0.0
        %892 = vadd.xlane.f32.xlu0 %v891
        %v893 = vpop.xlane.xlu0 %892
        %896 = vrot.lane.b32.xlu0 %v336, 96
        %v897 = vpop.permute.xlu0 %896
        %898 = vrot.lane.b32.xlu0 %v339, 96
        %v899 = vpop.permute.xlu0 %898
        %v903 = vsel %vm377, %v885, 0
        %v906 = vsel %vm377, %v887, 0
        %908 = vmatpush.msra.mxu0 0.0
        %909 = vmatpush.msra.mxu0 0.0
        %910 = vmatpush.msra.mxu0 0.0
        %911 = vmatpush.msra.mxu0 0.0
        %912 = vmatpush.msra.mxu0 0.0
        %913 = vmatpush.msra.mxu0 0.0
        %914 = vmatpush.msra.mxu0 0.0
        %915 = vmatpush.msra.mxu0 0.0
        %916 = vmatpush.msra.mxu0 0.0
        %917 = vmatpush.msra.mxu0 0.0
        %918 = vmatpush.msra.mxu0 0.0
        %919 = vmatpush.msra.mxu0 0.0
        %920 = vmatpush.msra.mxu0 0.0
        %921 = vmatpush.msra.mxu0 0.0
        %922 = vmatpush.msra.mxu0 %v899
        %923 = vmatpush.msra.mxu0 %v897
        %924 = vmatmul.f32.gmra.mxu0 %v903
        %v925 = vpop.f32.mrf.mxu0
        %v926 = vadd.f32 0.0, %v925
        %927 = vmatmul.f32.gmra.mxu0 %v906
        %v928 = vpop.f32.mrf.mxu0
        %v929 = vadd.f32 0.0, %v928
        %930 = vdwg.mxu0
        %v931 = vrcp.pop %v890
        %v932 = vrcp.pop %v893
        %v933 = vmul.f32 %v926, %v931
        %v934 = vmul.f32 %v929, %v932
        %935 = vrot.lane.b32.xlu0 %v278, 64
        %v936 = vpop.permute.xlu0 %935
        %937 = vrot.lane.b32.xlu0 %v281, 64
        %v938 = vpop.permute.xlu0 %937
        %939 = vrot.lane.b32.xlu0 %v307, 64
        %v940 = vpop.permute.xlu0 %939
        %941 = vrot.lane.b32.xlu0 %v310, 64
        %v942 = vpop.permute.xlu0 %941
        %v943 = vsel %vm341, %v936, 0
        %v945 = vsel %vm341, %v938, 0
        %v947 = vsel %vm341, %v940, 0
        %v949 = vsel %vm341, %v942, 0
        %951 = vmatpush.xpose.msra.mxu0 0.0
        %952 = vmatpush.xpose.msra.mxu0 0.0
        %953 = vmatpush.xpose.msra.mxu0 0.0
        %954 = vmatpush.xpose.msra.mxu0 0.0
        %955 = vmatpush.xpose.msra.mxu0 0.0
        %956 = vmatpush.xpose.msra.mxu0 0.0
        %957 = vmatpush.xpose.msra.mxu0 0.0
        %958 = vmatpush.xpose.msra.mxu0 0.0
        %959 = vmatpush.xpose.msra.mxu0 0.0
        %960 = vmatpush.xpose.msra.mxu0 0.0
        %961 = vmatpush.xpose.msra.mxu0 0.0
        %962 = vmatpush.xpose.msra.mxu0 0.0
        %963 = vmatpush.xpose.msra.mxu0 0.0
        %964 = vmatpush.xpose.msra.mxu0 0.0
        %965 = vmatpush.xpose.msra.mxu0 %v949
        %966 = vmatpush.xpose.msra.mxu0 %v947
        %967 = vmatmul.f32.gmra.mxu0 %v943
        %v968 = vpop.f32.mrf.mxu0
        %v969 = vadd.f32 0.0, %v968
        %970 = vmatmul.f32.gmra.mxu0 %v945
        %v971 = vpop.f32.mrf.mxu0
        %v972 = vadd.f32 0.0, %v971
        %973 = vdwg.mxu0
        %v974 = vsel %vm377, %v969, -inf
        %975 = vmax.xlane.f32.xlu0 %v974
        %v976 = vpop.xlane.xlu0 %975
        %v977 = vsel %vm377, %v972, -inf
        %978 = vmax.xlane.f32.xlu0 %v977
        %v979 = vpop.xlane.xlu0 %978
        %v980 = vsub.f32 %v969, %v976
        %v981 = vsub.f32 %v972, %v979
        %v982 = vmul.f32 %v980, 1.442695
        %v983 = vpow.pop %v982
        %v984 = vmul.f32 %v981, 1.442695
        %v985 = vpow.pop %v984
        %v986 = vsel %vm377, %v983, 0.0
        %987 = vadd.xlane.f32.xlu0 %v986
        %v988 = vpop.xlane.xlu0 %987
        %v989 = vsel %vm377, %v985, 0.0
        %990 = vadd.xlane.f32.xlu0 %v989
        %v991 = vpop.xlane.xlu0 %990
        %992 = vrot.lane.b32.xlu0 %v336, 64
        %v993 = vpop.permute.xlu0 %992
        %994 = vrot.lane.b32.xlu0 %v339, 64
        %v995 = vpop.permute.xlu0 %994
        %v999 = vsel %vm377, %v983, 0
        %v1002 = vsel %vm377, %v985, 0
        %1004 = vmatpush.msra.mxu0 0.0
        %1005 = vmatpush.msra.mxu0 0.0
        %1006 = vmatpush.msra.mxu0 0.0
        %1007 = vmatpush.msra.mxu0 0.0
        %1008 = vmatpush.msra.mxu0 0.0
        %1009 = vmatpush.msra.mxu0 0.0
        %1010 = vmatpush.msra.mxu0 0.0
        %1011 = vmatpush.msra.mxu0 0.0
        %1012 = vmatpush.msra.mxu0 0.0
        %1013 = vmatpush.msra.mxu0 0.0
        %1014 = vmatpush.msra.mxu0 0.0
        %1015 = vmatpush.msra.mxu0 0.0
        %1016 = vmatpush.msra.mxu0 0.0
        %1017 = vmatpush.msra.mxu0 0.0
        %1018 = vmatpush.msra.mxu0 %v995
        %1019 = vmatpush.msra.mxu0 %v993
        %1020 = vmatmul.f32.gmra.mxu0 %v999
        %v1021 = vpop.f32.mrf.mxu0
        %v1022 = vadd.f32 0.0, %v1021
        %1023 = vmatmul.f32.gmra.mxu0 %v1002
        %v1024 = vpop.f32.mrf.mxu0
        %v1025 = vadd.f32 0.0, %v1024
        %1026 = vdwg.mxu0
        %v1027 = vrcp.pop %v988
        %v1028 = vrcp.pop %v991
        %v1029 = vmul.f32 %v1022, %v1027
        %v1030 = vmul.f32 %v1025, %v1028
        %1031 = vrot.lane.b32.xlu0 %v278, 32
        %v1032 = vpop.permute.xlu0 %1031
        %1033 = vrot.lane.b32.xlu0 %v281, 32
        %v1034 = vpop.permute.xlu0 %1033
        %1035 = vrot.lane.b32.xlu0 %v307, 32
        %v1036 = vpop.permute.xlu0 %1035
        %1037 = vrot.lane.b32.xlu0 %v310, 32
        %v1038 = vpop.permute.xlu0 %1037
        %v1039 = vsel %vm341, %v1032, 0
        %v1041 = vsel %vm341, %v1034, 0
        %v1043 = vsel %vm341, %v1036, 0
        %v1045 = vsel %vm341, %v1038, 0
        %1047 = vmatpush.xpose.msra.mxu0 0.0
        %1048 = vmatpush.xpose.msra.mxu0 0.0
        %1049 = vmatpush.xpose.msra.mxu0 0.0
        %1050 = vmatpush.xpose.msra.mxu0 0.0
        %1051 = vmatpush.xpose.msra.mxu0 0.0
        %1052 = vmatpush.xpose.msra.mxu0 0.0
        %1053 = vmatpush.xpose.msra.mxu0 0.0
        %1054 = vmatpush.xpose.msra.mxu0 0.0
        %1055 = vmatpush.xpose.msra.mxu0 0.0
        %1056 = vmatpush.xpose.msra.mxu0 0.0
        %1057 = vmatpush.xpose.msra.mxu0 0.0
        %1058 = vmatpush.xpose.msra.mxu0 0.0
        %1059 = vmatpush.xpose.msra.mxu0 0.0
        %1060 = vmatpush.xpose.msra.mxu0 0.0
        %1061 = vmatpush.xpose.msra.mxu0 %v1045
        %1062 = vmatpush.xpose.msra.mxu0 %v1043
        %1063 = vmatmul.f32.gmra.mxu0 %v1039
        %v1064 = vpop.f32.mrf.mxu0
        %v1065 = vadd.f32 0.0, %v1064
        %1066 = vmatmul.f32.gmra.mxu0 %v1041
        %v1067 = vpop.f32.mrf.mxu0
        %v1068 = vadd.f32 0.0, %v1067
        %1069 = vdwg.mxu0
        %v1070 = vsel %vm377, %v1065, -inf
        %1071 = vmax.xlane.f32.xlu0 %v1070
        %v1072 = vpop.xlane.xlu0 %1071
        %v1073 = vsel %vm377, %v1068, -inf
        %1074 = vmax.xlane.f32.xlu0 %v1073
        %v1075 = vpop.xlane.xlu0 %1074
        %v1076 = vsub.f32 %v1065, %v1072
        %v1077 = vsub.f32 %v1068, %v1075
        %v1078 = vmul.f32 %v1076, 1.442695
        %v1079 = vpow.pop %v1078
        %v1080 = vmul.f32 %v1077, 1.442695
        %v1081 = vpow.pop %v1080
        %v1082 = vsel %vm377, %v1079, 0.0
        %1083 = vadd.xlane.f32.xlu0 %v1082
        %v1084 = vpop.xlane.xlu0 %1083
        %v1085 = vsel %vm377, %v1081, 0.0
        %1086 = vadd.xlane.f32.xlu0 %v1085
        %v1087 = vpop.xlane.xlu0 %1086
        %1088 = vrot.lane.b32.xlu0 %v336, 32
        %v1089 = vpop.permute.xlu0 %1088
        %1090 = vrot.lane.b32.xlu0 %v339, 32
        %v1091 = vpop.permute.xlu0 %1090
        %v1095 = vsel %vm377, %v1079, 0
        %v1098 = vsel %vm377, %v1081, 0
        %1100 = vmatpush.msra.mxu0 0.0
        %1101 = vmatpush.msra.mxu0 0.0
        %1102 = vmatpush.msra.mxu0 0.0
        %1103 = vmatpush.msra.mxu0 0.0
        %1104 = vmatpush.msra.mxu0 0.0
        %1105 = vmatpush.msra.mxu0 0.0
        %1106 = vmatpush.msra.mxu0 0.0
        %1107 = vmatpush.msra.mxu0 0.0
        %1108 = vmatpush.msra.mxu0 0.0
        %1109 = vmatpush.msra.mxu0 0.0
        %1110 = vmatpush.msra.mxu0 0.0
        %1111 = vmatpush.msra.mxu0 0.0
        %1112 = vmatpush.msra.mxu0 0.0
        %1113 = vmatpush.msra.mxu0 0.0
        %1114 = vmatpush.msra.mxu0 %v1091
        %1115 = vmatpush.msra.mxu0 %v1089
        %1116 = vmatmul.f32.gmra.mxu0 %v1095
        %v1117 = vpop.f32.mrf.mxu0
        %v1118 = vadd.f32 0.0, %v1117
        %1119 = vmatmul.f32.gmra.mxu0 %v1098
        %v1120 = vpop.f32.mrf.mxu0
        %v1121 = vadd.f32 0.0, %v1120
        %1122 = vdwg.mxu0
        %v1123 = vrcp.pop %v1084
        %v1124 = vrcp.pop %v1087
        %v1125 = vmul.f32 %v1118, %v1123
        %v1126 = vmul.f32 %v1121, %v1124
        %1129 = vrot.lane.b32.xlu0 %v933, 32
        %v1130 = vpop.permute.xlu0 %1129
        %1131 = vrot.lane.b32.xlu0 %v934, 32
        %v1132 = vpop.permute.xlu0 %1131
        %1137 = vrot.lane.b32.xlu0 %v1029, 64
        %v1138 = vpop.permute.xlu0 %1137
        %1139 = vrot.lane.b32.xlu0 %v1030, 64
        %v1140 = vpop.permute.xlu0 %1139
        %1145 = vrot.lane.b32.xlu0 %v1125, 96
        %v1146 = vpop.permute.xlu0 %1145
        %1147 = vrot.lane.b32.xlu0 %v1126, 96
        %v1148 = vpop.permute.xlu0 %1147
        %v1151 = vsel %vm341, %v835, %v1130
        %v1152 = vsel %vm341, %v836, %v1132
        %v1153 = vsel %vm745, %v1151, %v1138
        %v1154 = vsel %vm745, %v1152, %v1140
        %v1155 = vsel %vm748, %v1153, %v1146
        %v1156 = vsel %vm748, %v1154, %v1148
        %v1157 = vld [vmem:[%s2] sm:$0xff]
        %v1158 = vld [vmem:[%s2 + $0x8] sm:$0xff]
        %v1159 = vld [vmem:[%s2 + $0x10] sm:$0xff]
        %v1160 = vld [vmem:[%s2 + $0x18] sm:$0xff]
        %v1161 = vld [vmem:[%s2 + $0x20] sm:$0xff]
        %v1162 = vld [vmem:[%s2 + $0x28] sm:$0xff]
        %v1163 = vld [vmem:[%s2 + $0x30] sm:$0xff]
        %v1164 = vld [vmem:[%s2 + $0x38] sm:$0xff]
        %v1165 = vld [vmem:[%s2 + $0x40] sm:$0xff]
        %v1166 = vld [vmem:[%s2 + $0x48] sm:$0xff]
        %v1167 = vld [vmem:[%s2 + $0x50] sm:$0xff]
        %v1168 = vld [vmem:[%s2 + $0x58] sm:$0xff]
        %v1169 = vld [vmem:[%s2 + $0x60] sm:$0xff]
        %v1170 = vld [vmem:[%s2 + $0x68] sm:$0xff]
        %v1171 = vld [vmem:[%s2 + $0x70] sm:$0xff]
        %v1172 = vld [vmem:[%s2 + $0x78] sm:$0xff]
        %v1173 = vld [vmem:[%s3] sm:$0x1]
        %v1175 = vperm.slane %v1173, 0
        %1177 = vmatpush.msra.mxu0 %v1172
        %1178 = vmatpush.msra.mxu0 %v1171
        %1179 = vmatpush.msra.mxu0 %v1170
        %1180 = vmatpush.msra.mxu0 %v1169
        %1181 = vmatpush.msra.mxu0 %v1168
        %1182 = vmatpush.msra.mxu0 %v1167
        %1183 = vmatpush.msra.mxu0 %v1166
        %1184 = vmatpush.msra.mxu0 %v1165
        %1185 = vmatpush.msra.mxu0 %v1164
        %1186 = vmatpush.msra.mxu0 %v1163
        %1187 = vmatpush.msra.mxu0 %v1162
        %1188 = vmatpush.msra.mxu0 %v1161
        %1189 = vmatpush.msra.mxu0 %v1160
        %1190 = vmatpush.msra.mxu0 %v1159
        %1191 = vmatpush.msra.mxu0 %v1158
        %1192 = vmatpush.msra.mxu0 %v1157
        %1193 = vmatmul.f32.gmra.mxu0 %v749
        %v1194 = vpop.f32.mrf.mxu0
        %v1195 = vadd.f32 %v1175, %v1194
        %1196 = vmatmul.f32.gmra.mxu0 %v750
        %v1197 = vpop.f32.mrf.mxu0
        %v1198 = vadd.f32 %v1175, %v1197
        %1199 = vmatmul.f32.gmra.mxu0 %v1155
        %v1200 = vpop.f32.mrf.mxu0
        %v1201 = vadd.f32 %v1175, %v1200
        %1202 = vmatmul.f32.gmra.mxu0 %v1156
        %v1203 = vpop.f32.mrf.mxu0
        %v1204 = vadd.f32 %v1175, %v1203
        %1205 = vdwg.mxu0
        %1206 = vst [vmem:[%s193] sm:$0xff] %v1195
        %1207 = vst [vmem:[%s193 + $0x8] sm:$0xff] %v1198
        %1208 = vst [vmem:[%s193 + $0x10] sm:$0xff] %v1201
        %1209 = vst [vmem:[%s193 + $0x18] sm:$0xff] %v1204
        %s1210 = sand.u32 %s115, 1
        %s1211 = scalar_lea.sflag [#allocation3], %s1210
        %s1212 = sand.u32 %s115, 1
        %s1213 = smul.addr %s1212, 32
        %s1214 = scalar_lea.vmem [#allocation2], %s1213
        // Predicated region
        $region37: #{attention.1} parent=35 // pred_check
          %p1215 = pneg %p125
        $region38: #{attention.1} parent=35 // pred_check_branch
          %1217 = sbr.rel (%p1215) target = $region40
        $region39: #{attention.1} parent=35 // pred_region
          %s1218 = smul.u32 2, %s18
          %1220 = vsyncadd %s1211, 0
          %s1221 = smul.addr %s1218, 2
          %s1222 = smul.addr %s1221, 8
          %s1223 = scalar_lea.hbm %s4, %s1222
          %s1224 = sshll.u32 %s1214, 4
          %s1225 = int_to_ptr.vmem [resolvable:$true] %s1224
          %s1226 = sshll.u32 %s1223, 4
          %s1227 = int_to_ptr.hbm [resolvable:$true] %s1226
          %1232 = dma.vmem_to_hbm [thread:$0]  %s1225, 512, %s1227, %s1211, 128, 128, 8
        $region40: #{attention.1} parent=35 // pred_fallthru
          _
      $region36: #{attention.1} parent=5 // pred_fallthru
        _
      %p1233 = scmp.le.s32.totalorder 2, %s13
      // Predicated region
      $region41: #{attention.1} parent=5 // pred_check
        %p1234 = pneg %p1233
      $region42: #{attention.1} parent=5 // pred_check_branch
        %1236 = sbr.rel (%p1234) target = $region44
      $region43: #{attention.1} parent=5 // pred_region
        %s1237 = ssub.s32 %s13, 2
        // Predicated region
        $region45: #{attention.1} parent=43 // pred_check
          %p1238 = pneg %p131
        $region46: #{attention.1} parent=43 // pred_check_branch
          %1240 = sbr.rel (%p1238) target = $region48
        $region47: #{attention.1} parent=43 // pred_region
          %s1241 = sand.u32 %s116, 1
          %s1242 = scalar_lea.sflag [#allocation3], %s1241
          %s1243 = sand.u32 %s116, 1
          %s1244 = smul.addr %s1243, 32
          %s1245 = scalar_lea.vmem [#allocation2], %s1244
          %1247 = dma.done %s1242, 512
        $region48: #{attention.1} parent=43 // pred_fallthru
          _
      $region44: #{attention.1} parent=5 // pred_fallthru
        _
    $region6: #{attention.1} parent=1 // loop_footer
      %s17 = sadd.s32 1, %s13
    $region7: #{attention.1} parent=1 // loop_footer_branch
      %12 = sbr.rel target = $region3
    $region8: #{attention.1} parent=1 // loop_exit
      _
    %1248 = vsyncpa [#allocation3], 1
    %s1249 = scalar_lea.sflag [#allocation3], 1
    %1250 = vsyncpa %s1249, 1

</llo_original>
